<compile_context>
chip_gen: v7x
topology: tpu7x:2x2x1
jax: 0.10.0
libtpu: 0.0.40
codegen_flags: <defaults>
</compile_context>

<pallas_src>
import functools

import numpy as np
import jax
import jax.numpy as jnp
from jax.experimental import pallas as pl
from jax.experimental.pallas import tpu as pltpu

N_DIM = 8
N_BINS = 16
BATCH = 32
BOUND = 30.0
R = 1.2
BETA = 1e-8


def _build_mesh(n_bins, r, bound):
    """Replicates CDF_quadratic.__init__ buffers `mesh` and `elmt_size`."""
    m = n_bins / 2
    x1L = bound * (r - 1.0) / (r ** m - 1.0)
    index = np.arange(0, n_bins + 1, dtype=np.float32).reshape(-1, 1) - m
    xr = np.where(index >= 0,
                  (1.0 - np.power(r, index)) / (1.0 - r),
                  (1.0 - np.power(r, np.abs(index))) / (1.0 - r))
    xr = np.where(index >= 0, x1L * xr, -x1L * xr)
    xr = (xr + bound) / 2.0 / bound
    mesh = np.concatenate(
        [np.zeros((1, 1), np.float32), xr[1:-1], np.ones((1, 1), np.float32)], axis=0)
    elmt = mesh[1:] - mesh[:-1]
    return mesh.astype(np.float32), elmt.astype(np.float32)


def _scale_and_cdf_kernel(x_ref, shift_ref, scale_ref, pdf_ref, slope_ref, f_ref,
                          z_ref, ld_ref, *, mesh0, n_bins, bound, beta):
    """Per-tile work: affine (actnorm), quadratic CDF, clamps, logdet elements.

    mesh0 is a tuple of Python floats (compile-time constants); all per-feature
    tables (pdf / slope / F / shift / scale) arrive pre-tiled to the lane width.
    """
    x = x_ref[...]                                  # (TB, L)
    z = (x + shift_ref[...]) * scale_ref[...]       # actnorm affine

    xs = (z + bound) / (2.0 * bound)

    # bin index: count interior mesh points <= xs (only meaningful where cover)
    k = jnp.zeros(xs.shape, dtype=jnp.int32)
    for j in range(1, n_bins):
        k = k + (xs >= mesh0[j]).astype(jnp.int32)
    cover = jnp.logical_and(xs >= 0.0, xs < 1.0)    # mesh[0]=0, mesh[-1]=1 exactly

    zf = jnp.zeros_like(xs)
    v1, sl, Fp, xmesh = zf, zf, zf, zf
    for j in range(n_bins):
        m = (k == j)
        v1 = v1 + jnp.where(m, pdf_ref[j:j + 1, :], 0.0)
        sl = sl + jnp.where(m, slope_ref[j:j + 1, :], 0.0)
        Fp = Fp + jnp.where(m, f_ref[j:j + 1, :], 0.0)
        xmesh = xmesh + jnp.where(m, mesh0[j], 0.0)

    xmodi = xs - xmesh
    y = jnp.where(cover, Fp + 0.5 * xmodi * xmodi * sl + xmodi * v1, xs)
    dl = jnp.where(cover, xmodi * sl + v1, 1.0)

    log_beta = float(np.log(beta))                  # compile-time constant
    xo = y * (2.0 * bound) - bound
    xo = jnp.where(xo > bound, beta * (xo - bound) + bound, xo)
    hi = jnp.where(xo > bound, log_beta, 0.0)
    xo = jnp.where(xo < -bound, beta * (xo + bound) - bound, xo)
    lo = jnp.where(xo < -bound, log_beta, 0.0)

    z_ref[...] = xo
    ld_ref[...] = jnp.log(dl) + hi + lo             # per-element logdet contribution


def scale_and_cdf_forward(x, b, logs, p, logdet=None,
                          *, n_bins=N_BINS, r=R, bound=BOUND, beta=BETA):
    """Forward pass of scale_and_CDF (reverse=False)."""
    B, D = x.shape
    dt = jnp.float32
    mesh, elmt = _build_mesh(n_bins, r, bound)

    # ---------- actnorm data-dependent init + affine params (wrapper) ----------
    x_mean = jnp.mean(x, axis=0, keepdims=True)
    x_var = jnp.mean((x - x_mean) ** 2, axis=0, keepdims=True)
    b_init = -x_mean
    logs_init = jnp.log(1.0 / (jnp.sqrt(x_var) + 1e-6)) / 3.0
    s = jnp.clip(logs + logs_init, -5.0, 5.0)        # (1, D)
    shift = b + b_init                               # (1, D)
    scale = jnp.exp(s)                               # (1, D)
    sum_s = jnp.sum(s)                               # scalar actnorm logdet term

    # ---------- CDF parameter tables (p-only work, hoisted out of kernel) -------
    elmt_j = jnp.asarray(elmt)                       # (n_bins, 1)
    exp_p = jnp.exp(p)                               # (n_bins-1, D)
    px = exp_p * (elmt_j[:-1] + elmt_j[1:]) / 2.0
    px = (1.0 - (elmt_j[0] + elmt_j[-1]) * beta / 2.0) / jnp.sum(px, 0, keepdims=True)
    px = px * exp_p
    pdf = jnp.concatenate([jnp.full((1, D), beta, dt), px,
                           jnp.full((1, D), beta, dt)], axis=0)      # (n_bins+1, D)
    cell = (pdf[:-1] + pdf[1:]) / 2.0 * elmt_j
    F = jnp.concatenate([jnp.zeros((1, D), dt),
                         jnp.cumsum(cell, axis=0)[:n_bins - 1]], axis=0)  # (n_bins, D)
    slope = (pdf[1:] - pdf[:-1]) / elmt_j                                  # (n_bins, D)

    # ---------- lane-dense layout: pack G batch rows into the lane axis ----------
    G = max(1, min(B, 128 // max(D, 1)))
    while B % G != 0:
        G -= 1
    L = G * D
    rows = B // G

    def tile_lanes(a):
        return jnp.tile(a, (1, G))

    x2 = x.astype(dt).reshape(rows, L)
    shift2, scale2 = tile_lanes(shift), tile_lanes(scale)
    pdf2, slope2, F2 = tile_lanes(pdf), tile_lanes(slope), tile_lanes(F)

    # ---------- batch-tiled grid ----------
    TB = rows if rows <= 256 else 256
    grid = (pl.cdiv(rows, TB),)

    kern = functools.partial(
        _scale_and_cdf_kernel,
        mesh0=tuple(float(v) for v in mesh[:, 0]),
        n_bins=n_bins, bound=float(bound), beta=float(beta))

    row_spec = pl.BlockSpec((TB, L), lambda i: (i, 0))

    def param_spec(a):
        return pl.BlockSpec(a.shape, lambda i: (0, 0))

    z2, ld_elem = pl.pallas_call(
        kern,
        grid=grid,
        in_specs=[row_spec, param_spec(shift2), param_spec(scale2),
                  param_spec(pdf2), param_spec(slope2), param_spec(F2)],
        out_specs=[row_spec, row_spec],
        out_shape=[jax.ShapeDtypeStruct((rows, L), dt),
                   jax.ShapeDtypeStruct((rows, L), dt)],
        compiler_params=pltpu.CompilerParams(dimension_semantics=("parallel",)),
    )(x2, shift2, scale2, pdf2, slope2, F2)

    z = z2.reshape(B, D)
    if logdet is None:
        return z
    ld = logdet + sum_s + jnp.sum(ld_elem.reshape(B, D), axis=1, keepdims=True)
    return z, ld


def _reference(x, b, logs, p, logdet):
    """Pure-JAX mirror of the PyTorch forward (for a quick in-script check)."""
    mesh_np, elmt_np = _build_mesh(N_BINS, R, BOUND)
    mesh = jnp.asarray(mesh_np)
    elmt = jnp.asarray(elmt_np)
    bound, beta, n_bins = BOUND, BETA, N_BINS

    xm = jnp.mean(x, 0, keepdims=True)
    xv = jnp.mean((x - xm) ** 2, 0, keepdims=True)
    b_init = -xm
    logs_init = jnp.log(1.0 / (jnp.sqrt(xv) + 1e-6)) / 3.0
    s = jnp.clip(logs + logs_init, -5.0, 5.0)
    z = (x + b + b_init) * jnp.exp(s)
    logdet = logdet + jnp.sum(s)

    exp_p = jnp.exp(p)
    px = exp_p * (elmt[:-1] + elmt[1:]) / 2.0
    px = (1.0 - (elmt[0] + elmt[-1]) * beta / 2.0) / jnp.sum(px, 0, keepdims=True)
    px = px * exp_p
    D = p.shape[1]
    pdf = jnp.concatenate([jnp.full((1, D), beta), px, jnp.full((1, D), beta)], 0)
    cell = (pdf[:-1] + pdf[1:]) / 2.0 * elmt
    F_ref = jnp.concatenate([jnp.zeros((1, D)), jnp.cumsum(cell, 0)[:n_bins - 1]], 0)

    xs = (z + bound) / 2.0 / bound
    k_ind = jnp.sum((xs[..., None] >= mesh[:, 0]).astype(jnp.int32), -1) - 1
    cover = (k_ind * (k_ind - n_bins + 1) <= 0)
    k = jnp.clip(k_ind, 0, n_bins - 1)
    v1 = jnp.take_along_axis(pdf, k, axis=0)
    v2 = jnp.take_along_axis(pdf, k + 1, axis=0)
    xmodi = xs - mesh[:, 0][k]
    h = elmt[:, 0][k]
    Fp = jnp.take_along_axis(F_ref, k, axis=0)
    y = jnp.where(cover, Fp + xmodi ** 2 / 2.0 * (v2 - v1) / h + xmodi * v1, xs)
    dl = jnp.where(cover, xmodi * (v2 - v1) / h + v1, 1.0)
    logdet = logdet + jnp.sum(jnp.log(dl), 1, keepdims=True)

    xo = y * 2.0 * bound - bound
    xo = jnp.where(xo > bound, beta * (xo - bound) + bound, xo)
    logdet = logdet + jnp.sum(jnp.log(jnp.where(xo > bound, beta, 1.0)), 1, keepdims=True)
    xo = jnp.where(xo < -bound, beta * (xo + bound) - bound, xo)
    logdet = logdet + jnp.sum(jnp.log(jnp.where(xo < -bound, beta, 1.0)), 1, keepdims=True)
    return xo, logdet


if __name__ == "__main__":
    key = jax.random.PRNGKey(0)
    k1, k2, k3, k4 = jax.random.split(key, 4)
    # deterministic inputs / parameters (module __init__ shapes)
    x = jax.random.normal(k1, (BATCH, N_DIM), jnp.float32) * 5.0
    b = jax.random.normal(k2, (1, N_DIM), jnp.float32) * 0.1           # actnorm.b
    logs = jax.random.normal(k3, (1, N_DIM), jnp.float32) * 0.1        # actnorm.logs
    p = jax.random.normal(k4, (N_BINS - 1, N_DIM), jnp.float32) * 0.1  # CDF_quadratic.p
    logdet0 = jnp.zeros((BATCH, 1), jnp.float32)

    z, ld = scale_and_cdf_forward(x, b, logs, p, logdet0)
    jax.block_until_ready((z, ld))

    z_ref, ld_ref = _reference(x, b, logs, p, logdet0)
    assert np.allclose(np.asarray(z), np.asarray(z_ref), rtol=1e-5, atol=1e-5)
    assert np.allclose(np.asarray(ld), np.asarray(ld_ref), rtol=1e-4, atol=1e-4)

    print("KERNEL_OK")
</pallas_src>

<mosaic_0001>
module attributes {stable_mosaic.version = 11 : i64} {
  func.func @_scale_and_cdf_kernel(%arg0: i32, %arg1: memref<2x128xf32, #tpu.memory_space<vmem>>, %arg2: memref<1x128xf32, #tpu.memory_space<vmem>>, %arg3: memref<1x128xf32, #tpu.memory_space<vmem>>, %arg4: memref<17x128xf32, #tpu.memory_space<vmem>>, %arg5: memref<16x128xf32, #tpu.memory_space<vmem>>, %arg6: memref<16x128xf32, #tpu.memory_space<vmem>>, %arg7: memref<2x128xf32, #tpu.memory_space<vmem>>, %arg8: memref<2x128xf32, #tpu.memory_space<vmem>>) attributes {dimension_semantics = [#tpu.dimension_semantics<parallel>], iteration_bounds = array<i64: 1>, scalar_prefetch = 0 : i64, scratch_operands = 0 : i64, tpu.core_type = #tpu.core_type<tc>, window_params = [{transform_indices = @transform_0, window_bounds = array<i64: 2, 128>}, {pipeline_mode = #tpu.pipeline_mode<synchronous>, transform_indices = @transform_1, window_bounds = array<i64: 1, 128>}, {pipeline_mode = #tpu.pipeline_mode<synchronous>, transform_indices = @transform_2, window_bounds = array<i64: 1, 128>}, {pipeline_mode = #tpu.pipeline_mode<synchronous>, transform_indices = @transform_3, window_bounds = array<i64: 17, 128>}, {pipeline_mode = #tpu.pipeline_mode<synchronous>, transform_indices = @transform_4, window_bounds = array<i64: 16, 128>}, {pipeline_mode = #tpu.pipeline_mode<synchronous>, transform_indices = @transform_5, window_bounds = array<i64: 16, 128>}, {transform_indices = @transform_6, window_bounds = array<i64: 2, 128>}, {transform_indices = @transform_7, window_bounds = array<i64: 2, 128>}]} {
    %c0 = arith.constant 0 : index
    %c0_0 = arith.constant 0 : index
    %0 = vector.load %arg1[%c0, %c0_0] : memref<2x128xf32, #tpu.memory_space<vmem>>, vector<2x128xf32>
    %c0_1 = arith.constant 0 : index
    %c0_2 = arith.constant 0 : index
    %1 = vector.load %arg2[%c0_1, %c0_2] : memref<1x128xf32, #tpu.memory_space<vmem>>, vector<1x128xf32>
    %2 = vector.broadcast %1 : vector<1x128xf32> to vector<2x128xf32>
    %3 = arith.addf %0, %2 : vector<2x128xf32>
    %c0_3 = arith.constant 0 : index
    %c0_4 = arith.constant 0 : index
    %4 = vector.load %arg3[%c0_3, %c0_4] : memref<1x128xf32, #tpu.memory_space<vmem>>, vector<1x128xf32>
    %5 = vector.broadcast %4 : vector<1x128xf32> to vector<2x128xf32>
    %6 = arith.mulf %3, %5 : vector<2x128xf32>
    %cst = arith.constant 3.000000e+01 : f32
    %7 = vector.broadcast %cst : f32 to vector<2x128xf32>
    %8 = arith.addf %6, %7 : vector<2x128xf32>
    %cst_5 = arith.constant 6.000000e+01 : f32
    %9 = vector.broadcast %cst_5 : f32 to vector<2x128xf32>
    %10 = arith.divf %8, %9 : vector<2x128xf32>
    %c0_i32 = arith.constant 0 : i32
    %11 = vector.broadcast %c0_i32 : i32 to vector<2x128xi32>
    %cst_6 = arith.constant 0.108587109 : f32
    %12 = vector.broadcast %cst_6 : f32 to vector<2x128xf32>
    %13 = arith.cmpf oge, %10, %12 : vector<2x128xf32>
    %14 = arith.extui %13 : vector<2x128xi1> to vector<2x128xi32>
    %15 = arith.addi %11, %14 : vector<2x128xi32>
    %cst_7 = arith.constant 0.199076518 : f32
    %16 = vector.broadcast %cst_7 : f32 to vector<2x128xf32>
    %17 = arith.cmpf oge, %10, %16 : vector<2x128xf32>
    %18 = arith.extui %17 : vector<2x128xi1> to vector<2x128xi32>
    %19 = arith.addi %15, %18 : vector<2x128xi32>
    %cst_8 = arith.constant 0.274484366 : f32
    %20 = vector.broadcast %cst_8 : f32 to vector<2x128xf32>
    %21 = arith.cmpf oge, %10, %20 : vector<2x128xf32>
    %22 = arith.extui %21 : vector<2x128xi1> to vector<2x128xi32>
    %23 = arith.addi %19, %22 : vector<2x128xi32>
    %cst_9 = arith.constant 0.337324262 : f32
    %24 = vector.broadcast %cst_9 : f32 to vector<2x128xf32>
    %25 = arith.cmpf oge, %10, %24 : vector<2x128xf32>
    %26 = arith.extui %25 : vector<2x128xi1> to vector<2x128xi32>
    %27 = arith.addi %23, %26 : vector<2x128xi32>
    %cst_10 = arith.constant 0.389690816 : f32
    %28 = vector.broadcast %cst_10 : f32 to vector<2x128xf32>
    %29 = arith.cmpf oge, %10, %28 : vector<2x128xf32>
    %30 = arith.extui %29 : vector<2x128xi1> to vector<2x128xi32>
    %31 = arith.addi %27, %30 : vector<2x128xi32>
    %cst_11 = arith.constant 0.433329612 : f32
    %32 = vector.broadcast %cst_11 : f32 to vector<2x128xf32>
    %33 = arith.cmpf oge, %10, %32 : vector<2x128xf32>
    %34 = arith.extui %33 : vector<2x128xi1> to vector<2x128xi32>
    %35 = arith.addi %31, %34 : vector<2x128xi32>
    %cst_12 = arith.constant 0.46969527 : f32
    %36 = vector.broadcast %cst_12 : f32 to vector<2x128xf32>
    %37 = arith.cmpf oge, %10, %36 : vector<2x128xf32>
    %38 = arith.extui %37 : vector<2x128xi1> to vector<2x128xi32>
    %39 = arith.addi %35, %38 : vector<2x128xi32>
    %cst_13 = arith.constant 5.000000e-01 : f32
    %40 = vector.broadcast %cst_13 : f32 to vector<2x128xf32>
    %41 = arith.cmpf oge, %10, %40 : vector<2x128xf32>
    %42 = arith.extui %41 : vector<2x128xi1> to vector<2x128xi32>
    %43 = arith.addi %39, %42 : vector<2x128xi32>
    %cst_14 = arith.constant 0.53030473 : f32
    %44 = vector.broadcast %cst_14 : f32 to vector<2x128xf32>
    %45 = arith.cmpf oge, %10, %44 : vector<2x128xf32>
    %46 = arith.extui %45 : vector<2x128xi1> to vector<2x128xi32>
    %47 = arith.addi %43, %46 : vector<2x128xi32>
    %cst_15 = arith.constant 0.566670358 : f32
    %48 = vector.broadcast %cst_15 : f32 to vector<2x128xf32>
    %49 = arith.cmpf oge, %10, %48 : vector<2x128xf32>
    %50 = arith.extui %49 : vector<2x128xi1> to vector<2x128xi32>
    %51 = arith.addi %47, %50 : vector<2x128xi32>
    %cst_16 = arith.constant 0.610309243 : f32
    %52 = vector.broadcast %cst_16 : f32 to vector<2x128xf32>
    %53 = arith.cmpf oge, %10, %52 : vector<2x128xf32>
    %54 = arith.extui %53 : vector<2x128xi1> to vector<2x128xi32>
    %55 = arith.addi %51, %54 : vector<2x128xi32>
    %cst_17 = arith.constant 0.662675738 : f32
    %56 = vector.broadcast %cst_17 : f32 to vector<2x128xf32>
    %57 = arith.cmpf oge, %10, %56 : vector<2x128xf32>
    %58 = arith.extui %57 : vector<2x128xi1> to vector<2x128xi32>
    %59 = arith.addi %55, %58 : vector<2x128xi32>
    %cst_18 = arith.constant 0.725515604 : f32
    %60 = vector.broadcast %cst_18 : f32 to vector<2x128xf32>
    %61 = arith.cmpf oge, %10, %60 : vector<2x128xf32>
    %62 = arith.extui %61 : vector<2x128xi1> to vector<2x128xi32>
    %63 = arith.addi %59, %62 : vector<2x128xi32>
    %cst_19 = arith.constant 0.800923466 : f32
    %64 = vector.broadcast %cst_19 : f32 to vector<2x128xf32>
    %65 = arith.cmpf oge, %10, %64 : vector<2x128xf32>
    %66 = arith.extui %65 : vector<2x128xi1> to vector<2x128xi32>
    %67 = arith.addi %63, %66 : vector<2x128xi32>
    %cst_20 = arith.constant 0.891412854 : f32
    %68 = vector.broadcast %cst_20 : f32 to vector<2x128xf32>
    %69 = arith.cmpf oge, %10, %68 : vector<2x128xf32>
    %70 = arith.extui %69 : vector<2x128xi1> to vector<2x128xi32>
    %71 = arith.addi %67, %70 : vector<2x128xi32>
    %cst_21 = arith.constant 0.000000e+00 : f32
    %72 = vector.broadcast %cst_21 : f32 to vector<2x128xf32>
    %73 = arith.cmpf oge, %10, %72 : vector<2x128xf32>
    %cst_22 = arith.constant 1.000000e+00 : f32
    %74 = vector.broadcast %cst_22 : f32 to vector<2x128xf32>
    %75 = arith.cmpf olt, %10, %74 : vector<2x128xf32>
    %76 = arith.andi %73, %75 : vector<2x128xi1>
    %cst_23 = arith.constant 0.000000e+00 : f32
    %77 = vector.broadcast %cst_23 : f32 to vector<2x128xf32>
    %c0_i32_24 = arith.constant 0 : i32
    %78 = vector.broadcast %c0_i32_24 : i32 to vector<2x128xi32>
    %79 = arith.cmpi eq, %71, %78 : vector<2x128xi32>
    %c0_25 = arith.constant 0 : index
    %c0_26 = arith.constant 0 : index
    %80 = vector.load %arg4[%c0_25, %c0_26] : memref<17x128xf32, #tpu.memory_space<vmem>>, vector<1x128xf32>
    %cst_27 = arith.constant 0.000000e+00 : f32
    %81 = vector.shape_cast %80 : vector<1x128xf32> to vector<1x128xf32>
    %82 = vector.broadcast %81 : vector<1x128xf32> to vector<2x128xf32>
    %83 = vector.broadcast %cst_27 : f32 to vector<2x128xf32>
    %84 = arith.select %79, %82, %83 : vector<2x128xi1>, vector<2x128xf32>
    %85 = arith.addf %77, %84 : vector<2x128xf32>
    %c0_28 = arith.constant 0 : index
    %c0_29 = arith.constant 0 : index
    %86 = vector.load %arg5[%c0_28, %c0_29] : memref<16x128xf32, #tpu.memory_space<vmem>>, vector<1x128xf32>
    %cst_30 = arith.constant 0.000000e+00 : f32
    %87 = vector.shape_cast %86 : vector<1x128xf32> to vector<1x128xf32>
    %88 = vector.broadcast %87 : vector<1x128xf32> to vector<2x128xf32>
    %89 = vector.broadcast %cst_30 : f32 to vector<2x128xf32>
    %90 = arith.select %79, %88, %89 : vector<2x128xi1>, vector<2x128xf32>
    %91 = arith.addf %77, %90 : vector<2x128xf32>
    %c0_31 = arith.constant 0 : index
    %c0_32 = arith.constant 0 : index
    %92 = vector.load %arg6[%c0_31, %c0_32] : memref<16x128xf32, #tpu.memory_space<vmem>>, vector<1x128xf32>
    %cst_33 = arith.constant 0.000000e+00 : f32
    %93 = vector.shape_cast %92 : vector<1x128xf32> to vector<1x128xf32>
    %94 = vector.broadcast %93 : vector<1x128xf32> to vector<2x128xf32>
    %95 = vector.broadcast %cst_33 : f32 to vector<2x128xf32>
    %96 = arith.select %79, %94, %95 : vector<2x128xi1>, vector<2x128xf32>
    %97 = arith.addf %77, %96 : vector<2x128xf32>
    %cst_34 = arith.constant 0.000000e+00 : f32
    %cst_35 = arith.constant 0.000000e+00 : f32
    %98 = vector.broadcast %cst_34 : f32 to vector<2x128xf32>
    %99 = vector.broadcast %cst_35 : f32 to vector<2x128xf32>
    %100 = arith.select %79, %98, %99 : vector<2x128xi1>, vector<2x128xf32>
    %101 = arith.addf %77, %100 : vector<2x128xf32>
    %c1_i32 = arith.constant 1 : i32
    %102 = vector.broadcast %c1_i32 : i32 to vector<2x128xi32>
    %103 = arith.cmpi eq, %71, %102 : vector<2x128xi32>
    %c1 = arith.constant 1 : index
    %c0_36 = arith.constant 0 : index
    %104 = vector.load %arg4[%c1, %c0_36] : memref<17x128xf32, #tpu.memory_space<vmem>>, vector<1x128xf32>
    %cst_37 = arith.constant 0.000000e+00 : f32
    %105 = vector.shape_cast %104 : vector<1x128xf32> to vector<1x128xf32>
    %106 = vector.broadcast %105 : vector<1x128xf32> to vector<2x128xf32>
    %107 = vector.broadcast %cst_37 : f32 to vector<2x128xf32>
    %108 = arith.select %103, %106, %107 : vector<2x128xi1>, vector<2x128xf32>
    %109 = arith.addf %85, %108 : vector<2x128xf32>
    %c1_38 = arith.constant 1 : index
    %c0_39 = arith.constant 0 : index
    %110 = vector.load %arg5[%c1_38, %c0_39] : memref<16x128xf32, #tpu.memory_space<vmem>>, vector<1x128xf32>
    %cst_40 = arith.constant 0.000000e+00 : f32
    %111 = vector.shape_cast %110 : vector<1x128xf32> to vector<1x128xf32>
    %112 = vector.broadcast %111 : vector<1x128xf32> to vector<2x128xf32>
    %113 = vector.broadcast %cst_40 : f32 to vector<2x128xf32>
    %114 = arith.select %103, %112, %113 : vector<2x128xi1>, vector<2x128xf32>
    %115 = arith.addf %91, %114 : vector<2x128xf32>
    %c1_41 = arith.constant 1 : index
    %c0_42 = arith.constant 0 : index
    %116 = vector.load %arg6[%c1_41, %c0_42] : memref<16x128xf32, #tpu.memory_space<vmem>>, vector<1x128xf32>
    %cst_43 = arith.constant 0.000000e+00 : f32
    %117 = vector.shape_cast %116 : vector<1x128xf32> to vector<1x128xf32>
    %118 = vector.broadcast %117 : vector<1x128xf32> to vector<2x128xf32>
    %119 = vector.broadcast %cst_43 : f32 to vector<2x128xf32>
    %120 = arith.select %103, %118, %119 : vector<2x128xi1>, vector<2x128xf32>
    %121 = arith.addf %97, %120 : vector<2x128xf32>
    %cst_44 = arith.constant 0.108587109 : f32
    %cst_45 = arith.constant 0.000000e+00 : f32
    %122 = vector.broadcast %cst_44 : f32 to vector<2x128xf32>
    %123 = vector.broadcast %cst_45 : f32 to vector<2x128xf32>
    %124 = arith.select %103, %122, %123 : vector<2x128xi1>, vector<2x128xf32>
    %125 = arith.addf %101, %124 : vector<2x128xf32>
    %c2_i32 = arith.constant 2 : i32
    %126 = vector.broadcast %c2_i32 : i32 to vector<2x128xi32>
    %127 = arith.cmpi eq, %71, %126 : vector<2x128xi32>
    %c2 = arith.constant 2 : index
    %c0_46 = arith.constant 0 : index
    %128 = vector.load %arg4[%c2, %c0_46] : memref<17x128xf32, #tpu.memory_space<vmem>>, vector<1x128xf32>
    %cst_47 = arith.constant 0.000000e+00 : f32
    %129 = vector.shape_cast %128 : vector<1x128xf32> to vector<1x128xf32>
    %130 = vector.broadcast %129 : vector<1x128xf32> to vector<2x128xf32>
    %131 = vector.broadcast %cst_47 : f32 to vector<2x128xf32>
    %132 = arith.select %127, %130, %131 : vector<2x128xi1>, vector<2x128xf32>
    %133 = arith.addf %109, %132 : vector<2x128xf32>
    %c2_48 = arith.constant 2 : index
    %c0_49 = arith.constant 0 : index
    %134 = vector.load %arg5[%c2_48, %c0_49] : memref<16x128xf32, #tpu.memory_space<vmem>>, vector<1x128xf32>
    %cst_50 = arith.constant 0.000000e+00 : f32
    %135 = vector.shape_cast %134 : vector<1x128xf32> to vector<1x128xf32>
    %136 = vector.broadcast %135 : vector<1x128xf32> to vector<2x128xf32>
    %137 = vector.broadcast %cst_50 : f32 to vector<2x128xf32>
    %138 = arith.select %127, %136, %137 : vector<2x128xi1>, vector<2x128xf32>
    %139 = arith.addf %115, %138 : vector<2x128xf32>
    %c2_51 = arith.constant 2 : index
    %c0_52 = arith.constant 0 : index
    %140 = vector.load %arg6[%c2_51, %c0_52] : memref<16x128xf32, #tpu.memory_space<vmem>>, vector<1x128xf32>
    %cst_53 = arith.constant 0.000000e+00 : f32
    %141 = vector.shape_cast %140 : vector<1x128xf32> to vector<1x128xf32>
    %142 = vector.broadcast %141 : vector<1x128xf32> to vector<2x128xf32>
    %143 = vector.broadcast %cst_53 : f32 to vector<2x128xf32>
    %144 = arith.select %127, %142, %143 : vector<2x128xi1>, vector<2x128xf32>
    %145 = arith.addf %121, %144 : vector<2x128xf32>
    %cst_54 = arith.constant 0.199076518 : f32
    %cst_55 = arith.constant 0.000000e+00 : f32
    %146 = vector.broadcast %cst_54 : f32 to vector<2x128xf32>
    %147 = vector.broadcast %cst_55 : f32 to vector<2x128xf32>
    %148 = arith.select %127, %146, %147 : vector<2x128xi1>, vector<2x128xf32>
    %149 = arith.addf %125, %148 : vector<2x128xf32>
    %c3_i32 = arith.constant 3 : i32
    %150 = vector.broadcast %c3_i32 : i32 to vector<2x128xi32>
    %151 = arith.cmpi eq, %71, %150 : vector<2x128xi32>
    %c3 = arith.constant 3 : index
    %c0_56 = arith.constant 0 : index
    %152 = vector.load %arg4[%c3, %c0_56] : memref<17x128xf32, #tpu.memory_space<vmem>>, vector<1x128xf32>
    %cst_57 = arith.constant 0.000000e+00 : f32
    %153 = vector.shape_cast %152 : vector<1x128xf32> to vector<1x128xf32>
    %154 = vector.broadcast %153 : vector<1x128xf32> to vector<2x128xf32>
    %155 = vector.broadcast %cst_57 : f32 to vector<2x128xf32>
    %156 = arith.select %151, %154, %155 : vector<2x128xi1>, vector<2x128xf32>
    %157 = arith.addf %133, %156 : vector<2x128xf32>
    %c3_58 = arith.constant 3 : index
    %c0_59 = arith.constant 0 : index
    %158 = vector.load %arg5[%c3_58, %c0_59] : memref<16x128xf32, #tpu.memory_space<vmem>>, vector<1x128xf32>
    %cst_60 = arith.constant 0.000000e+00 : f32
    %159 = vector.shape_cast %158 : vector<1x128xf32> to vector<1x128xf32>
    %160 = vector.broadcast %159 : vector<1x128xf32> to vector<2x128xf32>
    %161 = vector.broadcast %cst_60 : f32 to vector<2x128xf32>
    %162 = arith.select %151, %160, %161 : vector<2x128xi1>, vector<2x128xf32>
    %163 = arith.addf %139, %162 : vector<2x128xf32>
    %c3_61 = arith.constant 3 : index
    %c0_62 = arith.constant 0 : index
    %164 = vector.load %arg6[%c3_61, %c0_62] : memref<16x128xf32, #tpu.memory_space<vmem>>, vector<1x128xf32>
    %cst_63 = arith.constant 0.000000e+00 : f32
    %165 = vector.shape_cast %164 : vector<1x128xf32> to vector<1x128xf32>
    %166 = vector.broadcast %165 : vector<1x128xf32> to vector<2x128xf32>
    %167 = vector.broadcast %cst_63 : f32 to vector<2x128xf32>
    %168 = arith.select %151, %166, %167 : vector<2x128xi1>, vector<2x128xf32>
    %169 = arith.addf %145, %168 : vector<2x128xf32>
    %cst_64 = arith.constant 0.274484366 : f32
    %cst_65 = arith.constant 0.000000e+00 : f32
    %170 = vector.broadcast %cst_64 : f32 to vector<2x128xf32>
    %171 = vector.broadcast %cst_65 : f32 to vector<2x128xf32>
    %172 = arith.select %151, %170, %171 : vector<2x128xi1>, vector<2x128xf32>
    %173 = arith.addf %149, %172 : vector<2x128xf32>
    %c4_i32 = arith.constant 4 : i32
    %174 = vector.broadcast %c4_i32 : i32 to vector<2x128xi32>
    %175 = arith.cmpi eq, %71, %174 : vector<2x128xi32>
    %c4 = arith.constant 4 : index
    %c0_66 = arith.constant 0 : index
    %176 = vector.load %arg4[%c4, %c0_66] : memref<17x128xf32, #tpu.memory_space<vmem>>, vector<1x128xf32>
    %cst_67 = arith.constant 0.000000e+00 : f32
    %177 = vector.shape_cast %176 : vector<1x128xf32> to vector<1x128xf32>
    %178 = vector.broadcast %177 : vector<1x128xf32> to vector<2x128xf32>
    %179 = vector.broadcast %cst_67 : f32 to vector<2x128xf32>
    %180 = arith.select %175, %178, %179 : vector<2x128xi1>, vector<2x128xf32>
    %181 = arith.addf %157, %180 : vector<2x128xf32>
    %c4_68 = arith.constant 4 : index
    %c0_69 = arith.constant 0 : index
    %182 = vector.load %arg5[%c4_68, %c0_69] : memref<16x128xf32, #tpu.memory_space<vmem>>, vector<1x128xf32>
    %cst_70 = arith.constant 0.000000e+00 : f32
    %183 = vector.shape_cast %182 : vector<1x128xf32> to vector<1x128xf32>
    %184 = vector.broadcast %183 : vector<1x128xf32> to vector<2x128xf32>
    %185 = vector.broadcast %cst_70 : f32 to vector<2x128xf32>
    %186 = arith.select %175, %184, %185 : vector<2x128xi1>, vector<2x128xf32>
    %187 = arith.addf %163, %186 : vector<2x128xf32>
    %c4_71 = arith.constant 4 : index
    %c0_72 = arith.constant 0 : index
    %188 = vector.load %arg6[%c4_71, %c0_72] : memref<16x128xf32, #tpu.memory_space<vmem>>, vector<1x128xf32>
    %cst_73 = arith.constant 0.000000e+00 : f32
    %189 = vector.shape_cast %188 : vector<1x128xf32> to vector<1x128xf32>
    %190 = vector.broadcast %189 : vector<1x128xf32> to vector<2x128xf32>
    %191 = vector.broadcast %cst_73 : f32 to vector<2x128xf32>
    %192 = arith.select %175, %190, %191 : vector<2x128xi1>, vector<2x128xf32>
    %193 = arith.addf %169, %192 : vector<2x128xf32>
    %cst_74 = arith.constant 0.337324262 : f32
    %cst_75 = arith.constant 0.000000e+00 : f32
    %194 = vector.broadcast %cst_74 : f32 to vector<2x128xf32>
    %195 = vector.broadcast %cst_75 : f32 to vector<2x128xf32>
    %196 = arith.select %175, %194, %195 : vector<2x128xi1>, vector<2x128xf32>
    %197 = arith.addf %173, %196 : vector<2x128xf32>
    %c5_i32 = arith.constant 5 : i32
    %198 = vector.broadcast %c5_i32 : i32 to vector<2x128xi32>
    %199 = arith.cmpi eq, %71, %198 : vector<2x128xi32>
    %c5 = arith.constant 5 : index
    %c0_76 = arith.constant 0 : index
    %200 = vector.load %arg4[%c5, %c0_76] : memref<17x128xf32, #tpu.memory_space<vmem>>, vector<1x128xf32>
    %cst_77 = arith.constant 0.000000e+00 : f32
    %201 = vector.shape_cast %200 : vector<1x128xf32> to vector<1x128xf32>
    %202 = vector.broadcast %201 : vector<1x128xf32> to vector<2x128xf32>
    %203 = vector.broadcast %cst_77 : f32 to vector<2x128xf32>
    %204 = arith.select %199, %202, %203 : vector<2x128xi1>, vector<2x128xf32>
    %205 = arith.addf %181, %204 : vector<2x128xf32>
    %c5_78 = arith.constant 5 : index
    %c0_79 = arith.constant 0 : index
    %206 = vector.load %arg5[%c5_78, %c0_79] : memref<16x128xf32, #tpu.memory_space<vmem>>, vector<1x128xf32>
    %cst_80 = arith.constant 0.000000e+00 : f32
    %207 = vector.shape_cast %206 : vector<1x128xf32> to vector<1x128xf32>
    %208 = vector.broadcast %207 : vector<1x128xf32> to vector<2x128xf32>
    %209 = vector.broadcast %cst_80 : f32 to vector<2x128xf32>
    %210 = arith.select %199, %208, %209 : vector<2x128xi1>, vector<2x128xf32>
    %211 = arith.addf %187, %210 : vector<2x128xf32>
    %c5_81 = arith.constant 5 : index
    %c0_82 = arith.constant 0 : index
    %212 = vector.load %arg6[%c5_81, %c0_82] : memref<16x128xf32, #tpu.memory_space<vmem>>, vector<1x128xf32>
    %cst_83 = arith.constant 0.000000e+00 : f32
    %213 = vector.shape_cast %212 : vector<1x128xf32> to vector<1x128xf32>
    %214 = vector.broadcast %213 : vector<1x128xf32> to vector<2x128xf32>
    %215 = vector.broadcast %cst_83 : f32 to vector<2x128xf32>
    %216 = arith.select %199, %214, %215 : vector<2x128xi1>, vector<2x128xf32>
    %217 = arith.addf %193, %216 : vector<2x128xf32>
    %cst_84 = arith.constant 0.389690816 : f32
    %cst_85 = arith.constant 0.000000e+00 : f32
    %218 = vector.broadcast %cst_84 : f32 to vector<2x128xf32>
    %219 = vector.broadcast %cst_85 : f32 to vector<2x128xf32>
    %220 = arith.select %199, %218, %219 : vector<2x128xi1>, vector<2x128xf32>
    %221 = arith.addf %197, %220 : vector<2x128xf32>
    %c6_i32 = arith.constant 6 : i32
    %222 = vector.broadcast %c6_i32 : i32 to vector<2x128xi32>
    %223 = arith.cmpi eq, %71, %222 : vector<2x128xi32>
    %c6 = arith.constant 6 : index
    %c0_86 = arith.constant 0 : index
    %224 = vector.load %arg4[%c6, %c0_86] : memref<17x128xf32, #tpu.memory_space<vmem>>, vector<1x128xf32>
    %cst_87 = arith.constant 0.000000e+00 : f32
    %225 = vector.shape_cast %224 : vector<1x128xf32> to vector<1x128xf32>
    %226 = vector.broadcast %225 : vector<1x128xf32> to vector<2x128xf32>
    %227 = vector.broadcast %cst_87 : f32 to vector<2x128xf32>
    %228 = arith.select %223, %226, %227 : vector<2x128xi1>, vector<2x128xf32>
    %229 = arith.addf %205, %228 : vector<2x128xf32>
    %c6_88 = arith.constant 6 : index
    %c0_89 = arith.constant 0 : index
    %230 = vector.load %arg5[%c6_88, %c0_89] : memref<16x128xf32, #tpu.memory_space<vmem>>, vector<1x128xf32>
    %cst_90 = arith.constant 0.000000e+00 : f32
    %231 = vector.shape_cast %230 : vector<1x128xf32> to vector<1x128xf32>
    %232 = vector.broadcast %231 : vector<1x128xf32> to vector<2x128xf32>
    %233 = vector.broadcast %cst_90 : f32 to vector<2x128xf32>
    %234 = arith.select %223, %232, %233 : vector<2x128xi1>, vector<2x128xf32>
    %235 = arith.addf %211, %234 : vector<2x128xf32>
    %c6_91 = arith.constant 6 : index
    %c0_92 = arith.constant 0 : index
    %236 = vector.load %arg6[%c6_91, %c0_92] : memref<16x128xf32, #tpu.memory_space<vmem>>, vector<1x128xf32>
    %cst_93 = arith.constant 0.000000e+00 : f32
    %237 = vector.shape_cast %236 : vector<1x128xf32> to vector<1x128xf32>
    %238 = vector.broadcast %237 : vector<1x128xf32> to vector<2x128xf32>
    %239 = vector.broadcast %cst_93 : f32 to vector<2x128xf32>
    %240 = arith.select %223, %238, %239 : vector<2x128xi1>, vector<2x128xf32>
    %241 = arith.addf %217, %240 : vector<2x128xf32>
    %cst_94 = arith.constant 0.433329612 : f32
    %cst_95 = arith.constant 0.000000e+00 : f32
    %242 = vector.broadcast %cst_94 : f32 to vector<2x128xf32>
    %243 = vector.broadcast %cst_95 : f32 to vector<2x128xf32>
    %244 = arith.select %223, %242, %243 : vector<2x128xi1>, vector<2x128xf32>
    %245 = arith.addf %221, %244 : vector<2x128xf32>
    %c7_i32 = arith.constant 7 : i32
    %246 = vector.broadcast %c7_i32 : i32 to vector<2x128xi32>
    %247 = arith.cmpi eq, %71, %246 : vector<2x128xi32>
    %c7 = arith.constant 7 : index
    %c0_96 = arith.constant 0 : index
    %248 = vector.load %arg4[%c7, %c0_96] : memref<17x128xf32, #tpu.memory_space<vmem>>, vector<1x128xf32>
    %cst_97 = arith.constant 0.000000e+00 : f32
    %249 = vector.shape_cast %248 : vector<1x128xf32> to vector<1x128xf32>
    %250 = vector.broadcast %249 : vector<1x128xf32> to vector<2x128xf32>
    %251 = vector.broadcast %cst_97 : f32 to vector<2x128xf32>
    %252 = arith.select %247, %250, %251 : vector<2x128xi1>, vector<2x128xf32>
    %253 = arith.addf %229, %252 : vector<2x128xf32>
    %c7_98 = arith.constant 7 : index
    %c0_99 = arith.constant 0 : index
    %254 = vector.load %arg5[%c7_98, %c0_99] : memref<16x128xf32, #tpu.memory_space<vmem>>, vector<1x128xf32>
    %cst_100 = arith.constant 0.000000e+00 : f32
    %255 = vector.shape_cast %254 : vector<1x128xf32> to vector<1x128xf32>
    %256 = vector.broadcast %255 : vector<1x128xf32> to vector<2x128xf32>
    %257 = vector.broadcast %cst_100 : f32 to vector<2x128xf32>
    %258 = arith.select %247, %256, %257 : vector<2x128xi1>, vector<2x128xf32>
    %259 = arith.addf %235, %258 : vector<2x128xf32>
    %c7_101 = arith.constant 7 : index
    %c0_102 = arith.constant 0 : index
    %260 = vector.load %arg6[%c7_101, %c0_102] : memref<16x128xf32, #tpu.memory_space<vmem>>, vector<1x128xf32>
    %cst_103 = arith.constant 0.000000e+00 : f32
    %261 = vector.shape_cast %260 : vector<1x128xf32> to vector<1x128xf32>
    %262 = vector.broadcast %261 : vector<1x128xf32> to vector<2x128xf32>
    %263 = vector.broadcast %cst_103 : f32 to vector<2x128xf32>
    %264 = arith.select %247, %262, %263 : vector<2x128xi1>, vector<2x128xf32>
    %265 = arith.addf %241, %264 : vector<2x128xf32>
    %cst_104 = arith.constant 0.46969527 : f32
    %cst_105 = arith.constant 0.000000e+00 : f32
    %266 = vector.broadcast %cst_104 : f32 to vector<2x128xf32>
    %267 = vector.broadcast %cst_105 : f32 to vector<2x128xf32>
    %268 = arith.select %247, %266, %267 : vector<2x128xi1>, vector<2x128xf32>
    %269 = arith.addf %245, %268 : vector<2x128xf32>
    %c8_i32 = arith.constant 8 : i32
    %270 = vector.broadcast %c8_i32 : i32 to vector<2x128xi32>
    %271 = arith.cmpi eq, %71, %270 : vector<2x128xi32>
    %c8 = arith.constant 8 : index
    %c0_106 = arith.constant 0 : index
    %272 = vector.load %arg4[%c8, %c0_106] : memref<17x128xf32, #tpu.memory_space<vmem>>, vector<1x128xf32>
    %cst_107 = arith.constant 0.000000e+00 : f32
    %273 = vector.shape_cast %272 : vector<1x128xf32> to vector<1x128xf32>
    %274 = vector.broadcast %273 : vector<1x128xf32> to vector<2x128xf32>
    %275 = vector.broadcast %cst_107 : f32 to vector<2x128xf32>
    %276 = arith.select %271, %274, %275 : vector<2x128xi1>, vector<2x128xf32>
    %277 = arith.addf %253, %276 : vector<2x128xf32>
    %c8_108 = arith.constant 8 : index
    %c0_109 = arith.constant 0 : index
    %278 = vector.load %arg5[%c8_108, %c0_109] : memref<16x128xf32, #tpu.memory_space<vmem>>, vector<1x128xf32>
    %cst_110 = arith.constant 0.000000e+00 : f32
    %279 = vector.shape_cast %278 : vector<1x128xf32> to vector<1x128xf32>
    %280 = vector.broadcast %279 : vector<1x128xf32> to vector<2x128xf32>
    %281 = vector.broadcast %cst_110 : f32 to vector<2x128xf32>
    %282 = arith.select %271, %280, %281 : vector<2x128xi1>, vector<2x128xf32>
    %283 = arith.addf %259, %282 : vector<2x128xf32>
    %c8_111 = arith.constant 8 : index
    %c0_112 = arith.constant 0 : index
    %284 = vector.load %arg6[%c8_111, %c0_112] : memref<16x128xf32, #tpu.memory_space<vmem>>, vector<1x128xf32>
    %cst_113 = arith.constant 0.000000e+00 : f32
    %285 = vector.shape_cast %284 : vector<1x128xf32> to vector<1x128xf32>
    %286 = vector.broadcast %285 : vector<1x128xf32> to vector<2x128xf32>
    %287 = vector.broadcast %cst_113 : f32 to vector<2x128xf32>
    %288 = arith.select %271, %286, %287 : vector<2x128xi1>, vector<2x128xf32>
    %289 = arith.addf %265, %288 : vector<2x128xf32>
    %cst_114 = arith.constant 5.000000e-01 : f32
    %cst_115 = arith.constant 0.000000e+00 : f32
    %290 = vector.broadcast %cst_114 : f32 to vector<2x128xf32>
    %291 = vector.broadcast %cst_115 : f32 to vector<2x128xf32>
    %292 = arith.select %271, %290, %291 : vector<2x128xi1>, vector<2x128xf32>
    %293 = arith.addf %269, %292 : vector<2x128xf32>
    %c9_i32 = arith.constant 9 : i32
    %294 = vector.broadcast %c9_i32 : i32 to vector<2x128xi32>
    %295 = arith.cmpi eq, %71, %294 : vector<2x128xi32>
    %c9 = arith.constant 9 : index
    %c0_116 = arith.constant 0 : index
    %296 = vector.load %arg4[%c9, %c0_116] : memref<17x128xf32, #tpu.memory_space<vmem>>, vector<1x128xf32>
    %cst_117 = arith.constant 0.000000e+00 : f32
    %297 = vector.shape_cast %296 : vector<1x128xf32> to vector<1x128xf32>
    %298 = vector.broadcast %297 : vector<1x128xf32> to vector<2x128xf32>
    %299 = vector.broadcast %cst_117 : f32 to vector<2x128xf32>
    %300 = arith.select %295, %298, %299 : vector<2x128xi1>, vector<2x128xf32>
    %301 = arith.addf %277, %300 : vector<2x128xf32>
    %c9_118 = arith.constant 9 : index
    %c0_119 = arith.constant 0 : index
    %302 = vector.load %arg5[%c9_118, %c0_119] : memref<16x128xf32, #tpu.memory_space<vmem>>, vector<1x128xf32>
    %cst_120 = arith.constant 0.000000e+00 : f32
    %303 = vector.shape_cast %302 : vector<1x128xf32> to vector<1x128xf32>
    %304 = vector.broadcast %303 : vector<1x128xf32> to vector<2x128xf32>
    %305 = vector.broadcast %cst_120 : f32 to vector<2x128xf32>
    %306 = arith.select %295, %304, %305 : vector<2x128xi1>, vector<2x128xf32>
    %307 = arith.addf %283, %306 : vector<2x128xf32>
    %c9_121 = arith.constant 9 : index
    %c0_122 = arith.constant 0 : index
    %308 = vector.load %arg6[%c9_121, %c0_122] : memref<16x128xf32, #tpu.memory_space<vmem>>, vector<1x128xf32>
    %cst_123 = arith.constant 0.000000e+00 : f32
    %309 = vector.shape_cast %308 : vector<1x128xf32> to vector<1x128xf32>
    %310 = vector.broadcast %309 : vector<1x128xf32> to vector<2x128xf32>
    %311 = vector.broadcast %cst_123 : f32 to vector<2x128xf32>
    %312 = arith.select %295, %310, %311 : vector<2x128xi1>, vector<2x128xf32>
    %313 = arith.addf %289, %312 : vector<2x128xf32>
    %cst_124 = arith.constant 0.53030473 : f32
    %cst_125 = arith.constant 0.000000e+00 : f32
    %314 = vector.broadcast %cst_124 : f32 to vector<2x128xf32>
    %315 = vector.broadcast %cst_125 : f32 to vector<2x128xf32>
    %316 = arith.select %295, %314, %315 : vector<2x128xi1>, vector<2x128xf32>
    %317 = arith.addf %293, %316 : vector<2x128xf32>
    %c10_i32 = arith.constant 10 : i32
    %318 = vector.broadcast %c10_i32 : i32 to vector<2x128xi32>
    %319 = arith.cmpi eq, %71, %318 : vector<2x128xi32>
    %c10 = arith.constant 10 : index
    %c0_126 = arith.constant 0 : index
    %320 = vector.load %arg4[%c10, %c0_126] : memref<17x128xf32, #tpu.memory_space<vmem>>, vector<1x128xf32>
    %cst_127 = arith.constant 0.000000e+00 : f32
    %321 = vector.shape_cast %320 : vector<1x128xf32> to vector<1x128xf32>
    %322 = vector.broadcast %321 : vector<1x128xf32> to vector<2x128xf32>
    %323 = vector.broadcast %cst_127 : f32 to vector<2x128xf32>
    %324 = arith.select %319, %322, %323 : vector<2x128xi1>, vector<2x128xf32>
    %325 = arith.addf %301, %324 : vector<2x128xf32>
    %c10_128 = arith.constant 10 : index
    %c0_129 = arith.constant 0 : index
    %326 = vector.load %arg5[%c10_128, %c0_129] : memref<16x128xf32, #tpu.memory_space<vmem>>, vector<1x128xf32>
    %cst_130 = arith.constant 0.000000e+00 : f32
    %327 = vector.shape_cast %326 : vector<1x128xf32> to vector<1x128xf32>
    %328 = vector.broadcast %327 : vector<1x128xf32> to vector<2x128xf32>
    %329 = vector.broadcast %cst_130 : f32 to vector<2x128xf32>
    %330 = arith.select %319, %328, %329 : vector<2x128xi1>, vector<2x128xf32>
    %331 = arith.addf %307, %330 : vector<2x128xf32>
    %c10_131 = arith.constant 10 : index
    %c0_132 = arith.constant 0 : index
    %332 = vector.load %arg6[%c10_131, %c0_132] : memref<16x128xf32, #tpu.memory_space<vmem>>, vector<1x128xf32>
    %cst_133 = arith.constant 0.000000e+00 : f32
    %333 = vector.shape_cast %332 : vector<1x128xf32> to vector<1x128xf32>
    %334 = vector.broadcast %333 : vector<1x128xf32> to vector<2x128xf32>
    %335 = vector.broadcast %cst_133 : f32 to vector<2x128xf32>
    %336 = arith.select %319, %334, %335 : vector<2x128xi1>, vector<2x128xf32>
    %337 = arith.addf %313, %336 : vector<2x128xf32>
    %cst_134 = arith.constant 0.566670358 : f32
    %cst_135 = arith.constant 0.000000e+00 : f32
    %338 = vector.broadcast %cst_134 : f32 to vector<2x128xf32>
    %339 = vector.broadcast %cst_135 : f32 to vector<2x128xf32>
    %340 = arith.select %319, %338, %339 : vector<2x128xi1>, vector<2x128xf32>
    %341 = arith.addf %317, %340 : vector<2x128xf32>
    %c11_i32 = arith.constant 11 : i32
    %342 = vector.broadcast %c11_i32 : i32 to vector<2x128xi32>
    %343 = arith.cmpi eq, %71, %342 : vector<2x128xi32>
    %c11 = arith.constant 11 : index
    %c0_136 = arith.constant 0 : index
    %344 = vector.load %arg4[%c11, %c0_136] : memref<17x128xf32, #tpu.memory_space<vmem>>, vector<1x128xf32>
    %cst_137 = arith.constant 0.000000e+00 : f32
    %345 = vector.shape_cast %344 : vector<1x128xf32> to vector<1x128xf32>
    %346 = vector.broadcast %345 : vector<1x128xf32> to vector<2x128xf32>
    %347 = vector.broadcast %cst_137 : f32 to vector<2x128xf32>
    %348 = arith.select %343, %346, %347 : vector<2x128xi1>, vector<2x128xf32>
    %349 = arith.addf %325, %348 : vector<2x128xf32>
    %c11_138 = arith.constant 11 : index
    %c0_139 = arith.constant 0 : index
    %350 = vector.load %arg5[%c11_138, %c0_139] : memref<16x128xf32, #tpu.memory_space<vmem>>, vector<1x128xf32>
    %cst_140 = arith.constant 0.000000e+00 : f32
    %351 = vector.shape_cast %350 : vector<1x128xf32> to vector<1x128xf32>
    %352 = vector.broadcast %351 : vector<1x128xf32> to vector<2x128xf32>
    %353 = vector.broadcast %cst_140 : f32 to vector<2x128xf32>
    %354 = arith.select %343, %352, %353 : vector<2x128xi1>, vector<2x128xf32>
    %355 = arith.addf %331, %354 : vector<2x128xf32>
    %c11_141 = arith.constant 11 : index
    %c0_142 = arith.constant 0 : index
    %356 = vector.load %arg6[%c11_141, %c0_142] : memref<16x128xf32, #tpu.memory_space<vmem>>, vector<1x128xf32>
    %cst_143 = arith.constant 0.000000e+00 : f32
    %357 = vector.shape_cast %356 : vector<1x128xf32> to vector<1x128xf32>
    %358 = vector.broadcast %357 : vector<1x128xf32> to vector<2x128xf32>
    %359 = vector.broadcast %cst_143 : f32 to vector<2x128xf32>
    %360 = arith.select %343, %358, %359 : vector<2x128xi1>, vector<2x128xf32>
    %361 = arith.addf %337, %360 : vector<2x128xf32>
    %cst_144 = arith.constant 0.610309243 : f32
    %cst_145 = arith.constant 0.000000e+00 : f32
    %362 = vector.broadcast %cst_144 : f32 to vector<2x128xf32>
    %363 = vector.broadcast %cst_145 : f32 to vector<2x128xf32>
    %364 = arith.select %343, %362, %363 : vector<2x128xi1>, vector<2x128xf32>
    %365 = arith.addf %341, %364 : vector<2x128xf32>
    %c12_i32 = arith.constant 12 : i32
    %366 = vector.broadcast %c12_i32 : i32 to vector<2x128xi32>
    %367 = arith.cmpi eq, %71, %366 : vector<2x128xi32>
    %c12 = arith.constant 12 : index
    %c0_146 = arith.constant 0 : index
    %368 = vector.load %arg4[%c12, %c0_146] : memref<17x128xf32, #tpu.memory_space<vmem>>, vector<1x128xf32>
    %cst_147 = arith.constant 0.000000e+00 : f32
    %369 = vector.shape_cast %368 : vector<1x128xf32> to vector<1x128xf32>
    %370 = vector.broadcast %369 : vector<1x128xf32> to vector<2x128xf32>
    %371 = vector.broadcast %cst_147 : f32 to vector<2x128xf32>
    %372 = arith.select %367, %370, %371 : vector<2x128xi1>, vector<2x128xf32>
    %373 = arith.addf %349, %372 : vector<2x128xf32>
    %c12_148 = arith.constant 12 : index
    %c0_149 = arith.constant 0 : index
    %374 = vector.load %arg5[%c12_148, %c0_149] : memref<16x128xf32, #tpu.memory_space<vmem>>, vector<1x128xf32>
    %cst_150 = arith.constant 0.000000e+00 : f32
    %375 = vector.shape_cast %374 : vector<1x128xf32> to vector<1x128xf32>
    %376 = vector.broadcast %375 : vector<1x128xf32> to vector<2x128xf32>
    %377 = vector.broadcast %cst_150 : f32 to vector<2x128xf32>
    %378 = arith.select %367, %376, %377 : vector<2x128xi1>, vector<2x128xf32>
    %379 = arith.addf %355, %378 : vector<2x128xf32>
    %c12_151 = arith.constant 12 : index
    %c0_152 = arith.constant 0 : index
    %380 = vector.load %arg6[%c12_151, %c0_152] : memref<16x128xf32, #tpu.memory_space<vmem>>, vector<1x128xf32>
    %cst_153 = arith.constant 0.000000e+00 : f32
    %381 = vector.shape_cast %380 : vector<1x128xf32> to vector<1x128xf32>
    %382 = vector.broadcast %381 : vector<1x128xf32> to vector<2x128xf32>
    %383 = vector.broadcast %cst_153 : f32 to vector<2x128xf32>
    %384 = arith.select %367, %382, %383 : vector<2x128xi1>, vector<2x128xf32>
    %385 = arith.addf %361, %384 : vector<2x128xf32>
    %cst_154 = arith.constant 0.662675738 : f32
    %cst_155 = arith.constant 0.000000e+00 : f32
    %386 = vector.broadcast %cst_154 : f32 to vector<2x128xf32>
    %387 = vector.broadcast %cst_155 : f32 to vector<2x128xf32>
    %388 = arith.select %367, %386, %387 : vector<2x128xi1>, vector<2x128xf32>
    %389 = arith.addf %365, %388 : vector<2x128xf32>
    %c13_i32 = arith.constant 13 : i32
    %390 = vector.broadcast %c13_i32 : i32 to vector<2x128xi32>
    %391 = arith.cmpi eq, %71, %390 : vector<2x128xi32>
    %c13 = arith.constant 13 : index
    %c0_156 = arith.constant 0 : index
    %392 = vector.load %arg4[%c13, %c0_156] : memref<17x128xf32, #tpu.memory_space<vmem>>, vector<1x128xf32>
    %cst_157 = arith.constant 0.000000e+00 : f32
    %393 = vector.shape_cast %392 : vector<1x128xf32> to vector<1x128xf32>
    %394 = vector.broadcast %393 : vector<1x128xf32> to vector<2x128xf32>
    %395 = vector.broadcast %cst_157 : f32 to vector<2x128xf32>
    %396 = arith.select %391, %394, %395 : vector<2x128xi1>, vector<2x128xf32>
    %397 = arith.addf %373, %396 : vector<2x128xf32>
    %c13_158 = arith.constant 13 : index
    %c0_159 = arith.constant 0 : index
    %398 = vector.load %arg5[%c13_158, %c0_159] : memref<16x128xf32, #tpu.memory_space<vmem>>, vector<1x128xf32>
    %cst_160 = arith.constant 0.000000e+00 : f32
    %399 = vector.shape_cast %398 : vector<1x128xf32> to vector<1x128xf32>
    %400 = vector.broadcast %399 : vector<1x128xf32> to vector<2x128xf32>
    %401 = vector.broadcast %cst_160 : f32 to vector<2x128xf32>
    %402 = arith.select %391, %400, %401 : vector<2x128xi1>, vector<2x128xf32>
    %403 = arith.addf %379, %402 : vector<2x128xf32>
    %c13_161 = arith.constant 13 : index
    %c0_162 = arith.constant 0 : index
    %404 = vector.load %arg6[%c13_161, %c0_162] : memref<16x128xf32, #tpu.memory_space<vmem>>, vector<1x128xf32>
    %cst_163 = arith.constant 0.000000e+00 : f32
    %405 = vector.shape_cast %404 : vector<1x128xf32> to vector<1x128xf32>
    %406 = vector.broadcast %405 : vector<1x128xf32> to vector<2x128xf32>
    %407 = vector.broadcast %cst_163 : f32 to vector<2x128xf32>
    %408 = arith.select %391, %406, %407 : vector<2x128xi1>, vector<2x128xf32>
    %409 = arith.addf %385, %408 : vector<2x128xf32>
    %cst_164 = arith.constant 0.725515604 : f32
    %cst_165 = arith.constant 0.000000e+00 : f32
    %410 = vector.broadcast %cst_164 : f32 to vector<2x128xf32>
    %411 = vector.broadcast %cst_165 : f32 to vector<2x128xf32>
    %412 = arith.select %391, %410, %411 : vector<2x128xi1>, vector<2x128xf32>
    %413 = arith.addf %389, %412 : vector<2x128xf32>
    %c14_i32 = arith.constant 14 : i32
    %414 = vector.broadcast %c14_i32 : i32 to vector<2x128xi32>
    %415 = arith.cmpi eq, %71, %414 : vector<2x128xi32>
    %c14 = arith.constant 14 : index
    %c0_166 = arith.constant 0 : index
    %416 = vector.load %arg4[%c14, %c0_166] : memref<17x128xf32, #tpu.memory_space<vmem>>, vector<1x128xf32>
    %cst_167 = arith.constant 0.000000e+00 : f32
    %417 = vector.shape_cast %416 : vector<1x128xf32> to vector<1x128xf32>
    %418 = vector.broadcast %417 : vector<1x128xf32> to vector<2x128xf32>
    %419 = vector.broadcast %cst_167 : f32 to vector<2x128xf32>
    %420 = arith.select %415, %418, %419 : vector<2x128xi1>, vector<2x128xf32>
    %421 = arith.addf %397, %420 : vector<2x128xf32>
    %c14_168 = arith.constant 14 : index
    %c0_169 = arith.constant 0 : index
    %422 = vector.load %arg5[%c14_168, %c0_169] : memref<16x128xf32, #tpu.memory_space<vmem>>, vector<1x128xf32>
    %cst_170 = arith.constant 0.000000e+00 : f32
    %423 = vector.shape_cast %422 : vector<1x128xf32> to vector<1x128xf32>
    %424 = vector.broadcast %423 : vector<1x128xf32> to vector<2x128xf32>
    %425 = vector.broadcast %cst_170 : f32 to vector<2x128xf32>
    %426 = arith.select %415, %424, %425 : vector<2x128xi1>, vector<2x128xf32>
    %427 = arith.addf %403, %426 : vector<2x128xf32>
    %c14_171 = arith.constant 14 : index
    %c0_172 = arith.constant 0 : index
    %428 = vector.load %arg6[%c14_171, %c0_172] : memref<16x128xf32, #tpu.memory_space<vmem>>, vector<1x128xf32>
    %cst_173 = arith.constant 0.000000e+00 : f32
    %429 = vector.shape_cast %428 : vector<1x128xf32> to vector<1x128xf32>
    %430 = vector.broadcast %429 : vector<1x128xf32> to vector<2x128xf32>
    %431 = vector.broadcast %cst_173 : f32 to vector<2x128xf32>
    %432 = arith.select %415, %430, %431 : vector<2x128xi1>, vector<2x128xf32>
    %433 = arith.addf %409, %432 : vector<2x128xf32>
    %cst_174 = arith.constant 0.800923466 : f32
    %cst_175 = arith.constant 0.000000e+00 : f32
    %434 = vector.broadcast %cst_174 : f32 to vector<2x128xf32>
    %435 = vector.broadcast %cst_175 : f32 to vector<2x128xf32>
    %436 = arith.select %415, %434, %435 : vector<2x128xi1>, vector<2x128xf32>
    %437 = arith.addf %413, %436 : vector<2x128xf32>
    %c15_i32 = arith.constant 15 : i32
    %438 = vector.broadcast %c15_i32 : i32 to vector<2x128xi32>
    %439 = arith.cmpi eq, %71, %438 : vector<2x128xi32>
    %c15 = arith.constant 15 : index
    %c0_176 = arith.constant 0 : index
    %440 = vector.load %arg4[%c15, %c0_176] : memref<17x128xf32, #tpu.memory_space<vmem>>, vector<1x128xf32>
    %cst_177 = arith.constant 0.000000e+00 : f32
    %441 = vector.shape_cast %440 : vector<1x128xf32> to vector<1x128xf32>
    %442 = vector.broadcast %441 : vector<1x128xf32> to vector<2x128xf32>
    %443 = vector.broadcast %cst_177 : f32 to vector<2x128xf32>
    %444 = arith.select %439, %442, %443 : vector<2x128xi1>, vector<2x128xf32>
    %445 = arith.addf %421, %444 : vector<2x128xf32>
    %c15_178 = arith.constant 15 : index
    %c0_179 = arith.constant 0 : index
    %446 = vector.load %arg5[%c15_178, %c0_179] : memref<16x128xf32, #tpu.memory_space<vmem>>, vector<1x128xf32>
    %cst_180 = arith.constant 0.000000e+00 : f32
    %447 = vector.shape_cast %446 : vector<1x128xf32> to vector<1x128xf32>
    %448 = vector.broadcast %447 : vector<1x128xf32> to vector<2x128xf32>
    %449 = vector.broadcast %cst_180 : f32 to vector<2x128xf32>
    %450 = arith.select %439, %448, %449 : vector<2x128xi1>, vector<2x128xf32>
    %451 = arith.addf %427, %450 : vector<2x128xf32>
    %c15_181 = arith.constant 15 : index
    %c0_182 = arith.constant 0 : index
    %452 = vector.load %arg6[%c15_181, %c0_182] : memref<16x128xf32, #tpu.memory_space<vmem>>, vector<1x128xf32>
    %cst_183 = arith.constant 0.000000e+00 : f32
    %453 = vector.shape_cast %452 : vector<1x128xf32> to vector<1x128xf32>
    %454 = vector.broadcast %453 : vector<1x128xf32> to vector<2x128xf32>
    %455 = vector.broadcast %cst_183 : f32 to vector<2x128xf32>
    %456 = arith.select %439, %454, %455 : vector<2x128xi1>, vector<2x128xf32>
    %457 = arith.addf %433, %456 : vector<2x128xf32>
    %cst_184 = arith.constant 0.891412854 : f32
    %cst_185 = arith.constant 0.000000e+00 : f32
    %458 = vector.broadcast %cst_184 : f32 to vector<2x128xf32>
    %459 = vector.broadcast %cst_185 : f32 to vector<2x128xf32>
    %460 = arith.select %439, %458, %459 : vector<2x128xi1>, vector<2x128xf32>
    %461 = arith.addf %437, %460 : vector<2x128xf32>
    %462 = arith.subf %10, %461 : vector<2x128xf32>
    %cst_186 = arith.constant 5.000000e-01 : f32
    %463 = vector.broadcast %cst_186 : f32 to vector<2x128xf32>
    %464 = arith.mulf %463, %462 : vector<2x128xf32>
    %465 = arith.mulf %464, %462 : vector<2x128xf32>
    %466 = arith.mulf %465, %451 : vector<2x128xf32>
    %467 = arith.addf %457, %466 : vector<2x128xf32>
    %468 = arith.mulf %462, %445 : vector<2x128xf32>
    %469 = arith.addf %467, %468 : vector<2x128xf32>
    %470 = arith.select %76, %469, %10 : vector<2x128xi1>, vector<2x128xf32>
    %471 = arith.mulf %462, %451 : vector<2x128xf32>
    %472 = arith.addf %471, %445 : vector<2x128xf32>
    %cst_187 = arith.constant 1.000000e+00 : f32
    %473 = vector.broadcast %cst_187 : f32 to vector<2x128xf32>
    %474 = arith.select %76, %472, %473 : vector<2x128xi1>, vector<2x128xf32>
    %cst_188 = arith.constant 6.000000e+01 : f32
    %475 = vector.broadcast %cst_188 : f32 to vector<2x128xf32>
    %476 = arith.mulf %470, %475 : vector<2x128xf32>
    %cst_189 = arith.constant 3.000000e+01 : f32
    %477 = vector.broadcast %cst_189 : f32 to vector<2x128xf32>
    %478 = arith.subf %476, %477 : vector<2x128xf32>
    %cst_190 = arith.constant 3.000000e+01 : f32
    %479 = vector.broadcast %cst_190 : f32 to vector<2x128xf32>
    %480 = arith.cmpf ogt, %478, %479 : vector<2x128xf32>
    %cst_191 = arith.constant 3.000000e+01 : f32
    %481 = vector.broadcast %cst_191 : f32 to vector<2x128xf32>
    %482 = arith.subf %478, %481 : vector<2x128xf32>
    %cst_192 = arith.constant 9.99999993E-9 : f32
    %483 = vector.broadcast %cst_192 : f32 to vector<2x128xf32>
    %484 = arith.mulf %483, %482 : vector<2x128xf32>
    %cst_193 = arith.constant 3.000000e+01 : f32
    %485 = vector.broadcast %cst_193 : f32 to vector<2x128xf32>
    %486 = arith.addf %484, %485 : vector<2x128xf32>
    %487 = arith.select %480, %486, %478 : vector<2x128xi1>, vector<2x128xf32>
    %cst_194 = arith.constant 3.000000e+01 : f32
    %488 = vector.broadcast %cst_194 : f32 to vector<2x128xf32>
    %489 = arith.cmpf ogt, %487, %488 : vector<2x128xf32>
    %cst_195 = arith.constant -18.420681 : f32
    %cst_196 = arith.constant 0.000000e+00 : f32
    %490 = vector.broadcast %cst_195 : f32 to vector<2x128xf32>
    %491 = vector.broadcast %cst_196 : f32 to vector<2x128xf32>
    %492 = arith.select %489, %490, %491 : vector<2x128xi1>, vector<2x128xf32>
    %cst_197 = arith.constant -3.000000e+01 : f32
    %493 = vector.broadcast %cst_197 : f32 to vector<2x128xf32>
    %494 = arith.cmpf olt, %487, %493 : vector<2x128xf32>
    %cst_198 = arith.constant 3.000000e+01 : f32
    %495 = vector.broadcast %cst_198 : f32 to vector<2x128xf32>
    %496 = arith.addf %487, %495 : vector<2x128xf32>
    %cst_199 = arith.constant 9.99999993E-9 : f32
    %497 = vector.broadcast %cst_199 : f32 to vector<2x128xf32>
    %498 = arith.mulf %497, %496 : vector<2x128xf32>
    %cst_200 = arith.constant 3.000000e+01 : f32
    %499 = vector.broadcast %cst_200 : f32 to vector<2x128xf32>
    %500 = arith.subf %498, %499 : vector<2x128xf32>
    %501 = arith.select %494, %500, %487 : vector<2x128xi1>, vector<2x128xf32>
    %cst_201 = arith.constant -3.000000e+01 : f32
    %502 = vector.broadcast %cst_201 : f32 to vector<2x128xf32>
    %503 = arith.cmpf olt, %501, %502 : vector<2x128xf32>
    %cst_202 = arith.constant -18.420681 : f32
    %cst_203 = arith.constant 0.000000e+00 : f32
    %504 = vector.broadcast %cst_202 : f32 to vector<2x128xf32>
    %505 = vector.broadcast %cst_203 : f32 to vector<2x128xf32>
    %506 = arith.select %503, %504, %505 : vector<2x128xi1>, vector<2x128xf32>
    %c0_204 = arith.constant 0 : index
    %c0_205 = arith.constant 0 : index
    %507 = vector.load %arg7[%c0_204, %c0_205] : memref<2x128xf32, #tpu.memory_space<vmem>>, vector<2x128xf32>
    tpu.vector_store %arg7[%c0_204, %c0_205], %501 {strides = array<i32>} : memref<2x128xf32, #tpu.memory_space<vmem>>, vector<2x128xf32>,
    %508 = math.log %474 : vector<2x128xf32>
    %509 = arith.addf %508, %492 : vector<2x128xf32>
    %510 = arith.addf %509, %506 : vector<2x128xf32>
    %c0_206 = arith.constant 0 : index
    %c0_207 = arith.constant 0 : index
    %511 = vector.load %arg8[%c0_206, %c0_207] : memref<2x128xf32, #tpu.memory_space<vmem>>, vector<2x128xf32>
    tpu.vector_store %arg8[%c0_206, %c0_207], %510 {strides = array<i32>} : memref<2x128xf32, #tpu.memory_space<vmem>>, vector<2x128xf32>,
    return
  }
  func.func @transform_0(%arg0: i32) -> (i32, i32) {
    %c0_i32 = arith.constant 0 : i32
    %c0_i32_0 = arith.constant 0 : i32
    return %arg0, %c0_i32 : i32, i32
  }
  func.func @transform_1(%arg0: i32) -> (i32, i32) {
    %c0_i32 = arith.constant 0 : i32
    %c0_i32_0 = arith.constant 0 : i32
    %c0_i32_1 = arith.constant 0 : i32
    return %c0_i32, %c0_i32_0 : i32, i32
  }
  func.func @transform_2(%arg0: i32) -> (i32, i32) {
    %c0_i32 = arith.constant 0 : i32
    %c0_i32_0 = arith.constant 0 : i32
    %c0_i32_1 = arith.constant 0 : i32
    return %c0_i32, %c0_i32_0 : i32, i32
  }
  func.func @transform_3(%arg0: i32) -> (i32, i32) {
    %c0_i32 = arith.constant 0 : i32
    %c0_i32_0 = arith.constant 0 : i32
    %c0_i32_1 = arith.constant 0 : i32
    return %c0_i32, %c0_i32_0 : i32, i32
  }
  func.func @transform_4(%arg0: i32) -> (i32, i32) {
    %c0_i32 = arith.constant 0 : i32
    %c0_i32_0 = arith.constant 0 : i32
    %c0_i32_1 = arith.constant 0 : i32
    return %c0_i32, %c0_i32_0 : i32, i32
  }
  func.func @transform_5(%arg0: i32) -> (i32, i32) {
    %c0_i32 = arith.constant 0 : i32
    %c0_i32_0 = arith.constant 0 : i32
    %c0_i32_1 = arith.constant 0 : i32
    return %c0_i32, %c0_i32_0 : i32, i32
  }
  func.func @transform_6(%arg0: i32) -> (i32, i32) {
    %c0_i32 = arith.constant 0 : i32
    %c0_i32_0 = arith.constant 0 : i32
    return %arg0, %c0_i32 : i32, i32
  }
  func.func @transform_7(%arg0: i32) -> (i32, i32) {
    %c0_i32 = arith.constant 0 : i32
    %c0_i32_0 = arith.constant 0 : i32
    return %arg0, %c0_i32 : i32, i32
  }
}

</mosaic_0001>

<llo_original>
// kernel: tpu_custom_call.1
$region0: #{tpu_custom_call.1}
  #allocation0 [shape = 'u32[]', space=smem, size = 0x4, offset = 0x4, fixed_abs, tag = 'smem constant byte address 0x4 - core index']
  #allocation1 [shape = 'u32[144,128]{1,0:T(1,128)}', space=vmem, size = 0x12000, scoped, tag = 'internal scratch']
  %s0 = inlined_call_operand.hbm [shape: f32[2,128], index: 0, kind: input, shape index: {}]
  %s1 = inlined_call_operand.vmem [shape: f32[1,128], index: 1, kind: input, shape index: {}]
  %s2 = inlined_call_operand.vmem [shape: f32[1,128], index: 2, kind: input, shape index: {}]
  %s3 = inlined_call_operand.hbm [shape: f32[17,128], index: 3, kind: input, shape index: {}]
  %s4 = inlined_call_operand.hbm [shape: f32[16,128], index: 4, kind: input, shape index: {}]
  %s5 = inlined_call_operand.vmem [shape: f32[16,128], index: 5, kind: input, shape index: {}]
  %s6 = inlined_call_operand.hbm [shape: f32[2,128], index: 6, kind: output, shape index: {0}]
  %s7 = inlined_call_operand.hbm [shape: f32[2,128], index: 7, kind: output, shape index: {1}]
  %8 = xla_tuple %s6, %s7
  %s9 = sld [smem:[#allocation0]]
  $region54: #{tpu_custom_call.1} parent=0
    _
  %s11 = ssub.s32 1, %s9
  %s12 = scalar_select 0, %s11, %s9
  $region1: #{tpu_custom_call.1} parent=0
    #allocation2 [shape = 'u8[1024]{0}', space=vmem, size = 0x400, scoped, tag = 'input window, operand 0, single buffered']
    #allocation3 [shape = 's32[1]{0}', space=sflag, size = 0x4, scoped, tag = 'scoped memory for tpu_custom_call.1']
    #allocation4 [shape = 's32[1]{0}', space=sflag, size = 0x4, scoped, tag = 'scoped memory for tpu_custom_call.1']
    #allocation5 [shape = 'u8[12288]{0}', space=vmem, size = 0x3000, scoped, tag = 'input window, operand 3, single buffered']
    #allocation6 [shape = 's32[1]{0}', space=sflag, size = 0x4, scoped, tag = 'scoped memory for tpu_custom_call.1']
    #allocation7 [shape = 'u8[8192]{0}', space=vmem, size = 0x2000, scoped, tag = 'input window, operand 4, single buffered']
    #allocation8 [shape = 'u8[1024]{0}', space=vmem, size = 0x400, scoped, tag = 'output window, operand 0, single buffered']
    #allocation9 [shape = 'u8[1024]{0}', space=vmem, size = 0x400, scoped, tag = 'output window, operand 1, single buffered']
    #allocation10 [shape = 's32[1]{0}', space=sflag, size = 0x4, scoped, tag = 'scoped memory for tpu_custom_call.1']
    %13 = vsyncpa [#allocation3], 0
    %14 = vsyncpa [#allocation6], 0
    %15 = vsyncpa [#allocation4], 0
    %16 = vsyncpa [#allocation10], 0
    // Predicated region
    $region2: #{tpu_custom_call.1} parent=1 // pred_check
      _
    $region3: #{tpu_custom_call.1} parent=1 // pred_check_branch
      %18 = sbr.rel (0) target = $region5
    $region4: #{tpu_custom_call.1} parent=1 // pred_region
      %s20 = ssub.s32 32, 32
      %21 = vsyncadd [#allocation3], %s20
      %s23 = sshll.u32 [#allocation2], 4
      %s24 = int_to_ptr.vmem [resolvable:$true] %s23
      %26 = dma.hbm_to_vmem [thread:$0]  %s0, 32, %s24, [#allocation3]
    $region5: #{tpu_custom_call.1} parent=1 // pred_fallthru
      _
    // Predicated region
    $region6: #{tpu_custom_call.1} parent=1 // pred_check
      _
    $region7: #{tpu_custom_call.1} parent=1 // pred_check_branch
      %28 = sbr.rel (0) target = $region9
    $region8: #{tpu_custom_call.1} parent=1 // pred_region
      _
    $region9: #{tpu_custom_call.1} parent=1 // pred_fallthru
      _
    // Predicated region
    $region10: #{tpu_custom_call.1} parent=1 // pred_check
      _
    $region11: #{tpu_custom_call.1} parent=1 // pred_check_branch
      %30 = sbr.rel (0) target = $region13
    $region12: #{tpu_custom_call.1} parent=1 // pred_region
      _
    $region13: #{tpu_custom_call.1} parent=1 // pred_fallthru
      _
    // Predicated region
    $region14: #{tpu_custom_call.1} parent=1 // pred_check
      _
    $region15: #{tpu_custom_call.1} parent=1 // pred_check_branch
      %32 = sbr.rel (0) target = $region17
    $region16: #{tpu_custom_call.1} parent=1 // pred_region
      %s34 = ssub.s32 384, 384
      %35 = vsyncadd [#allocation6], %s34
      %s36 = sshll.u32 [#allocation5], 4
      %s37 = int_to_ptr.vmem [resolvable:$true] %s36
      %42 = dma.hbm_to_vmem [thread:$0]  %s3, 384, %s37, [#allocation6], 128, 128, 8
    $region17: #{tpu_custom_call.1} parent=1 // pred_fallthru
      _
    // Predicated region
    $region18: #{tpu_custom_call.1} parent=1 // pred_check
      _
    $region19: #{tpu_custom_call.1} parent=1 // pred_check_branch
      %44 = sbr.rel (0) target = $region21
    $region20: #{tpu_custom_call.1} parent=1 // pred_region
      %s46 = ssub.s32 256, 256
      %47 = vsyncadd [#allocation6], %s46
      %s48 = sshll.u32 [#allocation7], 4
      %s49 = int_to_ptr.vmem [resolvable:$true] %s48
      %54 = dma.hbm_to_vmem [thread:$0]  %s4, 256, %s49, [#allocation6], 128, 128, 8
    $region21: #{tpu_custom_call.1} parent=1 // pred_fallthru
      _
    // Predicated region
    $region22: #{tpu_custom_call.1} parent=1 // pred_check
      _
    $region23: #{tpu_custom_call.1} parent=1 // pred_check_branch
      %56 = sbr.rel (0) target = $region25
    $region24: #{tpu_custom_call.1} parent=1 // pred_region
      _
    $region25: #{tpu_custom_call.1} parent=1 // pred_fallthru
      _
    // Predicated region
    $region26: #{tpu_custom_call.1} parent=1 // pred_check
      _
    $region27: #{tpu_custom_call.1} parent=1 // pred_check_branch
      %58 = sbr.rel (0) target = $region29
    $region28: #{tpu_custom_call.1} parent=1 // pred_region
      %59 = dma.done [#allocation3], 32
    $region29: #{tpu_custom_call.1} parent=1 // pred_fallthru
      _
    // Predicated region
    $region30: #{tpu_custom_call.1} parent=1 // pred_check
      _
    $region31: #{tpu_custom_call.1} parent=1 // pred_check_branch
      %61 = sbr.rel (0) target = $region33
    $region32: #{tpu_custom_call.1} parent=1 // pred_region
      %62 = dma.done [#allocation6], 384
    $region33: #{tpu_custom_call.1} parent=1 // pred_fallthru
      _
    // Predicated region
    $region34: #{tpu_custom_call.1} parent=1 // pred_check
      _
    $region35: #{tpu_custom_call.1} parent=1 // pred_check_branch
      %64 = sbr.rel (0) target = $region37
    $region36: #{tpu_custom_call.1} parent=1 // pred_region
      %65 = dma.done [#allocation6], 256
    $region37: #{tpu_custom_call.1} parent=1 // pred_fallthru
      _
    %v66 = vld [vmem:[#allocation2] sm:$0x3]
    %v67 = vld [vmem:[%s1] sm:$0x1]
    %v69 = vlaneseq
    %v70 = vshrl.u32 %v69, 7
    %v71 = vsub.s32 0, %v70
    %v72 = vrot.slane %v67, %v71
    %v74 = vadd.f32 %v66, %v72
    %v75 = vld [vmem:[%s2] sm:$0x1]
    %v77 = vlaneseq
    %v78 = vshrl.u32 %v77, 7
    %v79 = vsub.s32 0, %v78
    %v80 = vrot.slane %v75, %v79
    %v82 = vmul.f32 %v74, %v80
    %v83 = vadd.f32 %v82, 30.0
    %v84 = vrcp.pop 60.0
    %v85 = vmul.f32 %v83, %v84
    %vm86 = vcmp.ge.f32.partialorder %v85, 0.10858711
    %v87 = vsel %vm86, 1, 0
    %vm88 = vcmp.ge.f32.partialorder %v85, 0.19907652
    %v89 = vsel %vm88, 1, 0
    %v90 = vadd.s32 %v87, %v89
    %vm91 = vcmp.ge.f32.partialorder %v85, 0.27448437
    %v92 = vsel %vm91, 1, 0
    %v93 = vadd.s32 %v90, %v92
    %vm94 = vcmp.ge.f32.partialorder %v85, 0.33732426
    %v95 = vsel %vm94, 1, 0
    %v96 = vadd.s32 %v93, %v95
    %vm97 = vcmp.ge.f32.partialorder %v85, 0.38969082
    %v98 = vsel %vm97, 1, 0
    %v99 = vadd.s32 %v96, %v98
    %vm100 = vcmp.ge.f32.partialorder %v85, 0.4333296
    %v101 = vsel %vm100, 1, 0
    %v102 = vadd.s32 %v99, %v101
    %vm103 = vcmp.ge.f32.partialorder %v85, 0.46969527
    %v104 = vsel %vm103, 1, 0
    %v105 = vadd.s32 %v102, %v104
    %vm106 = vcmp.ge.f32.partialorder %v85, 0.5
    %v107 = vsel %vm106, 1, 0
    %v108 = vadd.s32 %v105, %v107
    %vm109 = vcmp.ge.f32.partialorder %v85, 0.53030473
    %v110 = vsel %vm109, 1, 0
    %v111 = vadd.s32 %v108, %v110
    %vm112 = vcmp.ge.f32.partialorder %v85, 0.56667036
    %v113 = vsel %vm112, 1, 0
    %v114 = vadd.s32 %v111, %v113
    %vm115 = vcmp.ge.f32.partialorder %v85, 0.61030924
    %v116 = vsel %vm115, 1, 0
    %v117 = vadd.s32 %v114, %v116
    %vm118 = vcmp.ge.f32.partialorder %v85, 0.66267574
    %v119 = vsel %vm118, 1, 0
    %v120 = vadd.s32 %v117, %v119
    %vm121 = vcmp.ge.f32.partialorder %v85, 0.7255156
    %v122 = vsel %vm121, 1, 0
    %v123 = vadd.s32 %v120, %v122
    %vm124 = vcmp.ge.f32.partialorder %v85, 0.80092347
    %v125 = vsel %vm124, 1, 0
    %v126 = vadd.s32 %v123, %v125
    %vm127 = vcmp.ge.f32.partialorder %v85, 0.89141285
    %v128 = vsel %vm127, 1, 0
    %v129 = vadd.s32 %v126, %v128
    %vm130 = vcmp.ge.f32.partialorder %v85, 0.0
    %vm131 = vcmp.lt.f32.partialorder %v85, 1.0
    %vm132 = vmand %vm130, %vm131
    %vm133 = vcmp.eq.s32.totalorder %v129, 0
    %v134 = vld [vmem:[#allocation5] sm:$0x1]
    %v135 = vlaneseq
    %v136 = vshrl.u32 %v135, 7
    %v137 = vsub.s32 0, %v136
    %v138 = vrot.slane %v134, %v137
    %v139 = vsel %vm133, %v138, 0.0
    %v140 = vadd.f32 %v139, 0.0
    %v141 = vld [vmem:[#allocation7] sm:$0x1]
    %v142 = vlaneseq
    %v143 = vshrl.u32 %v142, 7
    %v144 = vsub.s32 0, %v143
    %v145 = vrot.slane %v141, %v144
    %v146 = vsel %vm133, %v145, 0.0
    %v147 = vadd.f32 %v146, 0.0
    %v148 = vld [vmem:[%s5] sm:$0x1]
    %v149 = vlaneseq
    %v150 = vshrl.u32 %v149, 7
    %v151 = vsub.s32 0, %v150
    %v152 = vrot.slane %v148, %v151
    %v153 = vsel %vm133, %v152, 0.0
    %v154 = vadd.f32 %v153, 0.0
    %vm155 = vcmp.eq.s32.totalorder %v129, 1
    %v156 = vld [vmem:[#allocation5 + $0x1] sm:$0x1]
    %v157 = vlaneseq
    %v158 = vshrl.u32 %v157, 7
    %v159 = vsub.s32 0, %v158
    %v160 = vrot.slane %v156, %v159
    %v161 = vsel %vm155, %v160, 0.0
    %v162 = vadd.f32 %v140, %v161
    %v163 = vld [vmem:[#allocation7 + $0x1] sm:$0x1]
    %v164 = vlaneseq
    %v165 = vshrl.u32 %v164, 7
    %v166 = vsub.s32 0, %v165
    %v167 = vrot.slane %v163, %v166
    %v168 = vsel %vm155, %v167, 0.0
    %v169 = vadd.f32 %v147, %v168
    %v170 = vld [vmem:[%s5 + $0x1] sm:$0x1]
    %v171 = vlaneseq
    %v172 = vshrl.u32 %v171, 7
    %v173 = vsub.s32 0, %v172
    %v174 = vrot.slane %v170, %v173
    %v175 = vsel %vm155, %v174, 0.0
    %v176 = vadd.f32 %v154, %v175
    %v177 = vsel %vm155, 0.10858711, 0.0
    %v178 = vadd.f32 %v177, 0.0
    %vm179 = vcmp.eq.s32.totalorder %v129, 2
    %v180 = vld [vmem:[#allocation5 + $0x2] sm:$0x1]
    %v181 = vlaneseq
    %v182 = vshrl.u32 %v181, 7
    %v183 = vsub.s32 0, %v182
    %v184 = vrot.slane %v180, %v183
    %v185 = vsel %vm179, %v184, 0.0
    %v186 = vadd.f32 %v162, %v185
    %v187 = vld [vmem:[#allocation7 + $0x2] sm:$0x1]
    %v188 = vlaneseq
    %v189 = vshrl.u32 %v188, 7
    %v190 = vsub.s32 0, %v189
    %v191 = vrot.slane %v187, %v190
    %v192 = vsel %vm179, %v191, 0.0
    %v193 = vadd.f32 %v169, %v192
    %v194 = vld [vmem:[%s5 + $0x2] sm:$0x1]
    %v195 = vlaneseq
    %v196 = vshrl.u32 %v195, 7
    %v197 = vsub.s32 0, %v196
    %v198 = vrot.slane %v194, %v197
    %v199 = vsel %vm179, %v198, 0.0
    %v200 = vadd.f32 %v176, %v199
    %v201 = vsel %vm179, 0.19907652, 0.0
    %v202 = vadd.f32 %v178, %v201
    %vm203 = vcmp.eq.s32.totalorder %v129, 3
    %v204 = vld [vmem:[#allocation5 + $0x3] sm:$0x1]
    %v205 = vlaneseq
    %v206 = vshrl.u32 %v205, 7
    %v207 = vsub.s32 0, %v206
    %v208 = vrot.slane %v204, %v207
    %v209 = vsel %vm203, %v208, 0.0
    %v210 = vadd.f32 %v186, %v209
    %v211 = vld [vmem:[#allocation7 + $0x3] sm:$0x1]
    %v212 = vlaneseq
    %v213 = vshrl.u32 %v212, 7
    %v214 = vsub.s32 0, %v213
    %v215 = vrot.slane %v211, %v214
    %v216 = vsel %vm203, %v215, 0.0
    %v217 = vadd.f32 %v193, %v216
    %v218 = vld [vmem:[%s5 + $0x3] sm:$0x1]
    %v219 = vlaneseq
    %v220 = vshrl.u32 %v219, 7
    %v221 = vsub.s32 0, %v220
    %v222 = vrot.slane %v218, %v221
    %v223 = vsel %vm203, %v222, 0.0
    %v224 = vadd.f32 %v200, %v223
    %v225 = vsel %vm203, 0.27448437, 0.0
    %v226 = vadd.f32 %v202, %v225
    %vm227 = vcmp.eq.s32.totalorder %v129, 4
    %v228 = vld [vmem:[#allocation5 + $0x4] sm:$0x1]
    %v229 = vlaneseq
    %v230 = vshrl.u32 %v229, 7
    %v231 = vsub.s32 0, %v230
    %v232 = vrot.slane %v228, %v231
    %v233 = vsel %vm227, %v232, 0.0
    %v234 = vadd.f32 %v210, %v233
    %v235 = vld [vmem:[#allocation7 + $0x4] sm:$0x1]
    %v236 = vlaneseq
    %v237 = vshrl.u32 %v236, 7
    %v238 = vsub.s32 0, %v237
    %v239 = vrot.slane %v235, %v238
    %v240 = vsel %vm227, %v239, 0.0
    %v241 = vadd.f32 %v217, %v240
    %v242 = vld [vmem:[%s5 + $0x4] sm:$0x1]
    %v243 = vlaneseq
    %v244 = vshrl.u32 %v243, 7
    %v245 = vsub.s32 0, %v244
    %v246 = vrot.slane %v242, %v245
    %v247 = vsel %vm227, %v246, 0.0
    %v248 = vadd.f32 %v224, %v247
    %v249 = vsel %vm227, 0.33732426, 0.0
    %v250 = vadd.f32 %v226, %v249
    %vm251 = vcmp.eq.s32.totalorder %v129, 5
    %v252 = vld [vmem:[#allocation5 + $0x5] sm:$0x1]
    %v253 = vlaneseq
    %v254 = vshrl.u32 %v253, 7
    %v255 = vsub.s32 0, %v254
    %v256 = vrot.slane %v252, %v255
    %v257 = vsel %vm251, %v256, 0.0
    %v258 = vadd.f32 %v234, %v257
    %v259 = vld [vmem:[#allocation7 + $0x5] sm:$0x1]
    %v260 = vlaneseq
    %v261 = vshrl.u32 %v260, 7
    %v262 = vsub.s32 0, %v261
    %v263 = vrot.slane %v259, %v262
    %v264 = vsel %vm251, %v263, 0.0
    %v265 = vadd.f32 %v241, %v264
    %v266 = vld [vmem:[%s5 + $0x5] sm:$0x1]
    %v267 = vlaneseq
    %v268 = vshrl.u32 %v267, 7
    %v269 = vsub.s32 0, %v268
    %v270 = vrot.slane %v266, %v269
    %v271 = vsel %vm251, %v270, 0.0
    %v272 = vadd.f32 %v248, %v271
    %v273 = vsel %vm251, 0.38969082, 0.0
    %v274 = vadd.f32 %v250, %v273
    %vm275 = vcmp.eq.s32.totalorder %v129, 6
    %v276 = vld [vmem:[#allocation5 + $0x6] sm:$0x1]
    %v277 = vlaneseq
    %v278 = vshrl.u32 %v277, 7
    %v279 = vsub.s32 0, %v278
    %v280 = vrot.slane %v276, %v279
    %v281 = vsel %vm275, %v280, 0.0
    %v282 = vadd.f32 %v258, %v281
    %v283 = vld [vmem:[#allocation7 + $0x6] sm:$0x1]
    %v284 = vlaneseq
    %v285 = vshrl.u32 %v284, 7
    %v286 = vsub.s32 0, %v285
    %v287 = vrot.slane %v283, %v286
    %v288 = vsel %vm275, %v287, 0.0
    %v289 = vadd.f32 %v265, %v288
    %v290 = vld [vmem:[%s5 + $0x6] sm:$0x1]
    %v291 = vlaneseq
    %v292 = vshrl.u32 %v291, 7
    %v293 = vsub.s32 0, %v292
    %v294 = vrot.slane %v290, %v293
    %v295 = vsel %vm275, %v294, 0.0
    %v296 = vadd.f32 %v272, %v295
    %v297 = vsel %vm275, 0.4333296, 0.0
    %v298 = vadd.f32 %v274, %v297
    %vm299 = vcmp.eq.s32.totalorder %v129, 7
    %v300 = vld [vmem:[#allocation5 + $0x7] sm:$0x1]
    %v301 = vlaneseq
    %v302 = vshrl.u32 %v301, 7
    %v303 = vsub.s32 0, %v302
    %v304 = vrot.slane %v300, %v303
    %v305 = vsel %vm299, %v304, 0.0
    %v306 = vadd.f32 %v282, %v305
    %v307 = vld [vmem:[#allocation7 + $0x7] sm:$0x1]
    %v308 = vlaneseq
    %v309 = vshrl.u32 %v308, 7
    %v310 = vsub.s32 0, %v309
    %v311 = vrot.slane %v307, %v310
    %v312 = vsel %vm299, %v311, 0.0
    %v313 = vadd.f32 %v289, %v312
    %v314 = vld [vmem:[%s5 + $0x7] sm:$0x1]
    %v315 = vlaneseq
    %v316 = vshrl.u32 %v315, 7
    %v317 = vsub.s32 0, %v316
    %v318 = vrot.slane %v314, %v317
    %v319 = vsel %vm299, %v318, 0.0
    %v320 = vadd.f32 %v296, %v319
    %v321 = vsel %vm299, 0.46969527, 0.0
    %v322 = vadd.f32 %v298, %v321
    %vm323 = vcmp.eq.s32.totalorder %v129, 8
    %v324 = vld [vmem:[#allocation5 + $0x8] sm:$0x1]
    %v325 = vlaneseq
    %v326 = vshrl.u32 %v325, 7
    %v327 = vsub.s32 0, %v326
    %v328 = vrot.slane %v324, %v327
    %v329 = vsel %vm323, %v328, 0.0
    %v330 = vadd.f32 %v306, %v329
    %v331 = vld [vmem:[#allocation7 + $0x8] sm:$0x1]
    %v332 = vlaneseq
    %v333 = vshrl.u32 %v332, 7
    %v334 = vsub.s32 0, %v333
    %v335 = vrot.slane %v331, %v334
    %v336 = vsel %vm323, %v335, 0.0
    %v337 = vadd.f32 %v313, %v336
    %v338 = vld [vmem:[%s5 + $0x8] sm:$0x1]
    %v339 = vlaneseq
    %v340 = vshrl.u32 %v339, 7
    %v341 = vsub.s32 0, %v340
    %v342 = vrot.slane %v338, %v341
    %v343 = vsel %vm323, %v342, 0.0
    %v344 = vadd.f32 %v320, %v343
    %v345 = vsel %vm323, 0.5, 0.0
    %v346 = vadd.f32 %v322, %v345
    %vm347 = vcmp.eq.s32.totalorder %v129, 9
    %v348 = vld [vmem:[#allocation5 + $0x9] sm:$0x1]
    %v349 = vlaneseq
    %v350 = vshrl.u32 %v349, 7
    %v351 = vsub.s32 0, %v350
    %v352 = vrot.slane %v348, %v351
    %v353 = vsel %vm347, %v352, 0.0
    %v354 = vadd.f32 %v330, %v353
    %v355 = vld [vmem:[#allocation7 + $0x9] sm:$0x1]
    %v356 = vlaneseq
    %v357 = vshrl.u32 %v356, 7
    %v358 = vsub.s32 0, %v357
    %v359 = vrot.slane %v355, %v358
    %v360 = vsel %vm347, %v359, 0.0
    %v361 = vadd.f32 %v337, %v360
    %v362 = vld [vmem:[%s5 + $0x9] sm:$0x1]
    %v363 = vlaneseq
    %v364 = vshrl.u32 %v363, 7
    %v365 = vsub.s32 0, %v364
    %v366 = vrot.slane %v362, %v365
    %v367 = vsel %vm347, %v366, 0.0
    %v368 = vadd.f32 %v344, %v367
    %v369 = vsel %vm347, 0.53030473, 0.0
    %v370 = vadd.f32 %v346, %v369
    %vm371 = vcmp.eq.s32.totalorder %v129, 10
    %v372 = vld [vmem:[#allocation5 + $0xa] sm:$0x1]
    %v373 = vlaneseq
    %v374 = vshrl.u32 %v373, 7
    %v375 = vsub.s32 0, %v374
    %v376 = vrot.slane %v372, %v375
    %v377 = vsel %vm371, %v376, 0.0
    %v378 = vadd.f32 %v354, %v377
    %v379 = vld [vmem:[#allocation7 + $0xa] sm:$0x1]
    %v380 = vlaneseq
    %v381 = vshrl.u32 %v380, 7
    %v382 = vsub.s32 0, %v381
    %v383 = vrot.slane %v379, %v382
    %v384 = vsel %vm371, %v383, 0.0
    %v385 = vadd.f32 %v361, %v384
    %v386 = vld [vmem:[%s5 + $0xa] sm:$0x1]
    %v387 = vlaneseq
    %v388 = vshrl.u32 %v387, 7
    %v389 = vsub.s32 0, %v388
    %v390 = vrot.slane %v386, %v389
    %v391 = vsel %vm371, %v390, 0.0
    %v392 = vadd.f32 %v368, %v391
    %v393 = vsel %vm371, 0.56667036, 0.0
    %v394 = vadd.f32 %v370, %v393
    %vm395 = vcmp.eq.s32.totalorder %v129, 11
    %v396 = vld [vmem:[#allocation5 + $0xb] sm:$0x1]
    %v397 = vlaneseq
    %v398 = vshrl.u32 %v397, 7
    %v399 = vsub.s32 0, %v398
    %v400 = vrot.slane %v396, %v399
    %v401 = vsel %vm395, %v400, 0.0
    %v402 = vadd.f32 %v378, %v401
    %v403 = vld [vmem:[#allocation7 + $0xb] sm:$0x1]
    %v404 = vlaneseq
    %v405 = vshrl.u32 %v404, 7
    %v406 = vsub.s32 0, %v405
    %v407 = vrot.slane %v403, %v406
    %v408 = vsel %vm395, %v407, 0.0
    %v409 = vadd.f32 %v385, %v408
    %v410 = vld [vmem:[%s5 + $0xb] sm:$0x1]
    %v411 = vlaneseq
    %v412 = vshrl.u32 %v411, 7
    %v413 = vsub.s32 0, %v412
    %v414 = vrot.slane %v410, %v413
    %v415 = vsel %vm395, %v414, 0.0
    %v416 = vadd.f32 %v392, %v415
    %v417 = vsel %vm395, 0.61030924, 0.0
    %v418 = vadd.f32 %v394, %v417
    %vm419 = vcmp.eq.s32.totalorder %v129, 12
    %v420 = vld [vmem:[#allocation5 + $0xc] sm:$0x1]
    %v421 = vlaneseq
    %v422 = vshrl.u32 %v421, 7
    %v423 = vsub.s32 0, %v422
    %v424 = vrot.slane %v420, %v423
    %v425 = vsel %vm419, %v424, 0.0
    %v426 = vadd.f32 %v402, %v425
    %v427 = vld [vmem:[#allocation7 + $0xc] sm:$0x1]
    %v428 = vlaneseq
    %v429 = vshrl.u32 %v428, 7
    %v430 = vsub.s32 0, %v429
    %v431 = vrot.slane %v427, %v430
    %v432 = vsel %vm419, %v431, 0.0
    %v433 = vadd.f32 %v409, %v432
    %v434 = vld [vmem:[%s5 + $0xc] sm:$0x1]
    %v435 = vlaneseq
    %v436 = vshrl.u32 %v435, 7
    %v437 = vsub.s32 0, %v436
    %v438 = vrot.slane %v434, %v437
    %v439 = vsel %vm419, %v438, 0.0
    %v440 = vadd.f32 %v416, %v439
    %v441 = vsel %vm419, 0.66267574, 0.0
    %v442 = vadd.f32 %v418, %v441
    %vm443 = vcmp.eq.s32.totalorder %v129, 13
    %v444 = vld [vmem:[#allocation5 + $0xd] sm:$0x1]
    %v445 = vlaneseq
    %v446 = vshrl.u32 %v445, 7
    %v447 = vsub.s32 0, %v446
    %v448 = vrot.slane %v444, %v447
    %v449 = vsel %vm443, %v448, 0.0
    %v450 = vadd.f32 %v426, %v449
    %v451 = vld [vmem:[#allocation7 + $0xd] sm:$0x1]
    %v452 = vlaneseq
    %v453 = vshrl.u32 %v452, 7
    %v454 = vsub.s32 0, %v453
    %v455 = vrot.slane %v451, %v454
    %v456 = vsel %vm443, %v455, 0.0
    %v457 = vadd.f32 %v433, %v456
    %v458 = vld [vmem:[%s5 + $0xd] sm:$0x1]
    %v459 = vlaneseq
    %v460 = vshrl.u32 %v459, 7
    %v461 = vsub.s32 0, %v460
    %v462 = vrot.slane %v458, %v461
    %v463 = vsel %vm443, %v462, 0.0
    %v464 = vadd.f32 %v440, %v463
    %v465 = vsel %vm443, 0.7255156, 0.0
    %v466 = vadd.f32 %v442, %v465
    %vm467 = vcmp.eq.s32.totalorder %v129, 14
    %v468 = vld [vmem:[#allocation5 + $0xe] sm:$0x1]
    %v469 = vlaneseq
    %v470 = vshrl.u32 %v469, 7
    %v471 = vsub.s32 0, %v470
    %v472 = vrot.slane %v468, %v471
    %v473 = vsel %vm467, %v472, 0.0
    %v474 = vadd.f32 %v450, %v473
    %v475 = vld [vmem:[#allocation7 + $0xe] sm:$0x1]
    %v476 = vlaneseq
    %v477 = vshrl.u32 %v476, 7
    %v478 = vsub.s32 0, %v477
    %v479 = vrot.slane %v475, %v478
    %v480 = vsel %vm467, %v479, 0.0
    %v481 = vadd.f32 %v457, %v480
    %v482 = vld [vmem:[%s5 + $0xe] sm:$0x1]
    %v483 = vlaneseq
    %v484 = vshrl.u32 %v483, 7
    %v485 = vsub.s32 0, %v484
    %v486 = vrot.slane %v482, %v485
    %v487 = vsel %vm467, %v486, 0.0
    %v488 = vadd.f32 %v464, %v487
    %v489 = vsel %vm467, 0.80092347, 0.0
    %v490 = vadd.f32 %v466, %v489
    %vm491 = vcmp.eq.s32.totalorder %v129, 15
    %v492 = vld [vmem:[#allocation5 + $0xf] sm:$0x1]
    %v493 = vlaneseq
    %v494 = vshrl.u32 %v493, 7
    %v495 = vsub.s32 0, %v494
    %v496 = vrot.slane %v492, %v495
    %v497 = vsel %vm491, %v496, 0.0
    %v498 = vadd.f32 %v474, %v497
    %v499 = vld [vmem:[#allocation7 + $0xf] sm:$0x1]
    %v500 = vlaneseq
    %v501 = vshrl.u32 %v500, 7
    %v502 = vsub.s32 0, %v501
    %v503 = vrot.slane %v499, %v502
    %v504 = vsel %vm491, %v503, 0.0
    %v505 = vadd.f32 %v481, %v504
    %v506 = vld [vmem:[%s5 + $0xf] sm:$0x1]
    %v507 = vlaneseq
    %v508 = vshrl.u32 %v507, 7
    %v509 = vsub.s32 0, %v508
    %v510 = vrot.slane %v506, %v509
    %v511 = vsel %vm491, %v510, 0.0
    %v512 = vadd.f32 %v488, %v511
    %v513 = vsel %vm491, 0.89141285, 0.0
    %v514 = vadd.f32 %v490, %v513
    %v515 = vsub.f32 %v85, %v514
    %v516 = vmul.f32 %v515, 0.5
    %v517 = vmul.f32 %v516, %v515
    %v518 = vmul.f32 %v517, %v505
    %v519 = vadd.f32 %v512, %v518
    %v520 = vmul.f32 %v515, %v498
    %v521 = vadd.f32 %v519, %v520
    %v522 = vsel %vm132, %v521, %v85
    %v523 = vmul.f32 %v515, %v505
    %v524 = vadd.f32 %v523, %v498
    %v525 = vsel %vm132, %v524, 1.0
    %v526 = vmul.f32 %v522, 60.0
    %v527 = vsub.f32 %v526, 30.0
    %vm528 = vcmp.gt.f32.partialorder %v527, 30.0
    %v529 = vsub.f32 %v527, 30.0
    %v530 = vmul.f32 %v529, 1e-08
    %v531 = vadd.f32 %v530, 30.0
    %v532 = vsel %vm528, %v531, %v527
    %vm533 = vcmp.gt.f32.partialorder %v532, 30.0
    %v534 = vsel %vm533, -18.420681, 0.0
    %vm535 = vcmp.lt.f32.partialorder %v532, -30.0
    %v536 = vadd.f32 %v532, 30.0
    %v537 = vmul.f32 %v536, 1e-08
    %v538 = vsub.f32 %v537, 30.0
    %v539 = vsel %vm535, %v538, %v532
    %vm540 = vcmp.lt.f32.partialorder %v539, -30.0
    %v541 = vsel %vm540, -18.420681, 0.0
    %542 = vst [vmem:[#allocation8] sm:$0x3] %v539
    %v543 = vlog2.pop %v525
    %v544 = vmul.f32 %v543, 0.6931472
    %v545 = vadd.f32 %v544, %v534
    %v546 = vadd.f32 %v545, %v541
    %547 = vst [vmem:[#allocation9] sm:$0x3] %v546
    // Predicated region
    $region38: #{tpu_custom_call.1} parent=1 // pred_check
      _
    $region39: #{tpu_custom_call.1} parent=1 // pred_check_branch
      %549 = sbr.rel (0) target = $region41
    $region40: #{tpu_custom_call.1} parent=1 // pred_region
      %s551 = ssub.s32 32, 32
      %552 = vsyncadd [#allocation4], %s551
      %s554 = sshll.u32 [#allocation8], 4
      %s555 = int_to_ptr.vmem [resolvable:$true] %s554
      %557 = dma.vmem_to_hbm [thread:$0]  %s555, 32, %s6, [#allocation4]
    $region41: #{tpu_custom_call.1} parent=1 // pred_fallthru
      _
    // Predicated region
    $region42: #{tpu_custom_call.1} parent=1 // pred_check
      _
    $region43: #{tpu_custom_call.1} parent=1 // pred_check_branch
      %559 = sbr.rel (0) target = $region45
    $region44: #{tpu_custom_call.1} parent=1 // pred_region
      %s561 = ssub.s32 32, 32
      %562 = vsyncadd [#allocation10], %s561
      %s564 = sshll.u32 [#allocation9], 4
      %s565 = int_to_ptr.vmem [resolvable:$true] %s564
      %567 = dma.vmem_to_hbm [thread:$0]  %s565, 32, %s7, [#allocation10]
    $region45: #{tpu_custom_call.1} parent=1 // pred_fallthru
      _
    // Predicated region
    $region46: #{tpu_custom_call.1} parent=1 // pred_check
      _
    $region47: #{tpu_custom_call.1} parent=1 // pred_check_branch
      %569 = sbr.rel (0) target = $region49
    $region48: #{tpu_custom_call.1} parent=1 // pred_region
      %570 = dma.done [#allocation4], 32
    $region49: #{tpu_custom_call.1} parent=1 // pred_fallthru
      _
    // Predicated region
    $region50: #{tpu_custom_call.1} parent=1 // pred_check
      _
    $region51: #{tpu_custom_call.1} parent=1 // pred_check_branch
      %572 = sbr.rel (0) target = $region53
    $region52: #{tpu_custom_call.1} parent=1 // pred_region
      %573 = dma.done [#allocation10], 32
    $region53: #{tpu_custom_call.1} parent=1 // pred_fallthru
      _
    %574 = vsyncpa [#allocation3], 1
    %575 = vsyncpa [#allocation6], 1
    %576 = vsyncpa [#allocation4], 1
    %577 = vsyncpa [#allocation10], 1

</llo_original>
